<compile_context>
chip_gen: v5e
topology: v5e:2x2
jax: 0.10.0
libtpu: 0.0.40
codegen_flags: <defaults>
</compile_context>

<pallas_src>
import functools

import jax
import jax.numpy as jnp
from jax import lax
from jax.experimental import pallas as pl
from jax.experimental.pallas import tpu as pltpu


# ----------------------------------------------------------------------------
# Fused Pallas kernel (one or more images per grid step)
# ----------------------------------------------------------------------------
def _sp_fused_kernel(x_ref, m_ref, w3_ref, b3_ref, w5_ref, b5_ref, o_ref, *,
                     dilations, W, HW, cout):
  """Fused SPModule forward.

  x_ref : (IPS, Cin, HW)        IPS images of this grid step (NCHW, space flat)
  m_ref : (NB*8, IPS*HW)        precomputed border masks (non-center taps)
  w3_ref: (NB*9*Cout, Cin)      all branch 3x3 weights, rows [branch, tap, cout]
  b3_ref: (NB*Cout, 1)          concatenated branch biases
  w5_ref: (Cfin, NB*Cout)       1x1 down-channel weights
  b5_ref: (Cfin, 1)             1x1 bias
  o_ref : (IPS, Cfin, HW)       output
  """
  nb = len(dilations)
  ips = x_ref.shape[0]
  L = ips * HW

  # Images side-by-side along lanes: (Cin, L); lane widths are multiples of 128.
  if ips == 1:
    x = x_ref[0]
  else:
    x = jnp.concatenate([x_ref[b] for b in range(ips)], axis=1)

  # ONE MXU push for all 4 branches x 9 taps.
  prod = jnp.dot(w3_ref[...], x, preferred_element_type=jnp.float32)  # (nb*9*Cout, L)

  mrow = 0
  ys = []
  for i in range(nb):
    d = int(dilations[i])
    acc = None
    for t in range(9):
      dy = (t // 3 - 1) * d
      dx = (t % 3 - 1) * d
      g = i * 9 + t
      piece = prod[g * cout:(g + 1) * cout, :]          # 8-row aligned slice
      if dy == 0 and dx == 0:
        term = piece
      else:
        # shifted[:, p] = piece[:, p + dy*W + dx] for all valid p.  Valid
        # positions never leave their own image block, so a circular lane
        # rotation + precomputed border mask is exact.
        s = (dy * W + dx) % L
        shifted = pltpu.roll(piece, shift=L - s, axis=1)   # left-rotate by s (XLU)
        term = shifted * m_ref[mrow:mrow + 1, :]           # precomputed mask (VPU)
        mrow += 1
      acc = term if acc is None else acc + term
    # ReLU(dilated_conv_i(x))
    ys.append(jnp.maximum(acc + b3_ref[i * cout:(i + 1) * cout, :], 0.0))

  # Channel concat (in VMEM/vregs) + 1x1 conv + ReLU.
  ycat = jnp.concatenate(ys, axis=0)                      # (nb*Cout, L)
  out = jnp.dot(w5_ref[...], ycat, preferred_element_type=jnp.float32)
  out = jnp.maximum(out + b5_ref[...], 0.0)               # (Cfin, L)

  # Lane-dense per-image stores (HW = 256, a multiple of 128 -> unmasked vst).
  for b in range(ips):
    o_ref[b] = out[:, b * HW:(b + 1) * HW].astype(o_ref.dtype)


# ----------------------------------------------------------------------------
# One-time prepack (hoisted out of the hot path)
# ----------------------------------------------------------------------------
def _images_per_step(batch):
  """v7x has 2 TensorCores: keep batch as the parallel grid axis there.
  Single-TC chips (v5e/v6e): merge the whole batch into one grid step."""
  try:
    kind = jax.devices()[0].device_kind.lower()
  except Exception:
    kind = ""
  multi_tc = ("v7" in kind) or ("tpu7" in kind)
  return 1 if multi_tc else batch


def prepack_params(params, dilations, H, W, imgs_per_step):
  nb = len(dilations)
  cout = params["b3_0"].shape[0]
  HW = H * W

  # (Cout, Cin, 3, 3) OIHW -> rows ordered [branch, tap, cout], cols = Cin.
  w3 = jnp.concatenate([
      jnp.transpose(params[f"w3_{i}"], (2, 3, 0, 1)).reshape(9 * cout, -1)
      for i in range(nb)], axis=0)                               # (nb*9*Cout, Cin)
  b3 = jnp.concatenate([params[f"b3_{i}"] for i in range(nb)])[:, None]  # (nb*Cout,1)
  w5 = params["w5"]                                              # (Cfin, nb*Cout)
  b5 = params["b5"][:, None]                                     # (Cfin, 1)

  # Border-validity masks for the nb*8 non-center taps, tiled per image so
  # row/col reset at image boundaries when batches are merged into lanes.
  q = jnp.arange(HW, dtype=jnp.int32)
  row, col = q // W, q % W
  mrows = []
  for i in range(nb):
    d = int(dilations[i])
    for t in range(9):
      dy, dx = (t // 3 - 1) * d, (t % 3 - 1) * d
      if dy == 0 and dx == 0:
        continue
      valid = ((row + dy >= 0) & (row + dy < H) &
               (col + dx >= 0) & (col + dx < W))
      mrows.append(valid.astype(jnp.float32))
  masks = jnp.tile(jnp.stack(mrows), (1, imgs_per_step))          # (nb*8, L)
  return w3, b3, w5, b5, masks


def build_sp_forward(params, in_shape, dilations=(2, 4, 8, 12)):
  """Prepack once; return a jitted forward whose hot path is one pallas_call."""
  B, Cin, H, W = in_shape
  HW = H * W
  nb = len(dilations)
  cout = params["b3_0"].shape[0]
  cfin = params["b5"].shape[0]

  ips = _images_per_step(B)          # images per grid step
  num_steps = B // ips
  L = ips * HW

  w3, b3, w5, b5, masks = prepack_params(params, dilations, H, W, ips)

  kernel = functools.partial(_sp_fused_kernel,
                             dilations=tuple(int(d) for d in dilations),
                             W=W, HW=HW, cout=cout)

  flops = 2 * B * HW * (Cin * 9 * cout * nb + nb * cout * cfin)
  bytes_accessed = 4 * (B * Cin * HW + B * cfin * HW +
                        w3.size + b3.size + w5.size + b5.size + masks.size)
  cost = pl.CostEstimate(flops=int(flops), transcendentals=0,
                         bytes_accessed=int(bytes_accessed))

  grid_fn = pl.pallas_call(
      kernel,
      out_shape=jax.ShapeDtypeStruct((B, cfin, HW), jnp.float32),
      grid=(num_steps,),
      in_specs=[
          pl.BlockSpec((ips, Cin, HW), lambda s: (s, 0, 0)),
          pl.BlockSpec((nb * 8, L), lambda s: (0, 0)),
          pl.BlockSpec((nb * 9 * cout, Cin), lambda s: (0, 0)),
          pl.BlockSpec((nb * cout, 1), lambda s: (0, 0)),
          pl.BlockSpec((cfin, nb * cout), lambda s: (0, 0)),
          pl.BlockSpec((cfin, 1), lambda s: (0, 0)),
      ],
      out_specs=pl.BlockSpec((ips, cfin, HW), lambda s: (s, 0, 0)),
      compiler_params=pltpu.CompilerParams(
          dimension_semantics=("parallel",)),
      cost_estimate=cost,
  )

  @jax.jit
  def forward(x_nchw):
    x_flat = x_nchw.reshape(B, Cin, HW)                # free reshape
    out = grid_fn(x_flat, masks, w3, b3, w5, b5)
    return out.reshape(B, cfin, H, W)                  # free reshape

  return forward


# ----------------------------------------------------------------------------
# Parameters (PyTorch-style layouts: OIHW conv weights)
# ----------------------------------------------------------------------------
def init_params(key, in_channels, branch_out=None):
  if not branch_out:
    branch_out = in_channels
  keys = jax.random.split(key, 10)
  params = {}
  for i in range(4):
    params[f"w3_{i}"] = 0.1 * jax.random.normal(
        keys[2 * i], (branch_out, in_channels, 3, 3), jnp.float32)  # OIHW
    params[f"b3_{i}"] = 0.1 * jax.random.normal(
        keys[2 * i + 1], (branch_out,), jnp.float32)
  params["w5"] = 0.1 * jax.random.normal(
      keys[8], (in_channels, 4 * branch_out), jnp.float32)          # (O, I) of 1x1
  params["b5"] = 0.1 * jax.random.normal(
      keys[9], (in_channels,), jnp.float32)
  return params


# ----------------------------------------------------------------------------
# Pure-JAX reference (PyTorch semantics) for correctness check
# ----------------------------------------------------------------------------
def _ref_forward(x_nchw, params, dilations=(2, 4, 8, 12)):
  outs = []
  for i, d in enumerate(dilations):
    y = lax.conv_general_dilated(
        x_nchw, params[f"w3_{i}"], window_strides=(1, 1),
        padding=[(d, d), (d, d)], rhs_dilation=(d, d),
        dimension_numbers=("NCHW", "OIHW", "NCHW"))
    outs.append(jax.nn.relu(y + params[f"b3_{i}"][None, :, None, None]))
  cat = jnp.concatenate(outs, axis=1)
  y = jnp.einsum("bchw,oc->bohw", cat, params["w5"])
  return jax.nn.relu(y + params["b5"][None, :, None, None])


# ----------------------------------------------------------------------------
if __name__ == "__main__":
  B, Cin, H, W = 2, 4, 16, 16
  branch_out = 8
  dilations = (2, 4, 8, 12)   # SPModule's dilations/paddings

  key = jax.random.PRNGKey(0)
  kx, kp = jax.random.split(key)
  x = jax.random.normal(kx, (B, Cin, H, W), jnp.float32)   # NCHW, like PyTorch
  params = init_params(kp, Cin, branch_out)

  fwd = build_sp_forward(params, (B, Cin, H, W), dilations)   # prepack once
  out = jax.block_until_ready(fwd(x))                         # hot path: 1 pallas_call
  assert out.shape == (B, Cin, H, W), out.shape

  ref = _ref_forward(x, params, dilations)
  max_err = float(jnp.max(jnp.abs(out - ref)))
  assert jnp.allclose(out, ref, atol=2e-3, rtol=2e-3), max_err

  print("KERNEL_OK")
</pallas_src>

<mosaic_0001>
module attributes {stable_mosaic.version = 11 : i64} {
  func.func @_sp_fused_kernel(%arg0: i32, %arg1: memref<2x4x256xf32, #tpu.memory_space<vmem>>, %arg2: memref<32x512xf32, #tpu.memory_space<vmem>>, %arg3: memref<288x4xf32, #tpu.memory_space<vmem>>, %arg4: memref<32x1xf32, #tpu.memory_space<vmem>>, %arg5: memref<4x32xf32, #tpu.memory_space<vmem>>, %arg6: memref<4x1xf32, #tpu.memory_space<vmem>>, %arg7: memref<2x4x256xf32, #tpu.memory_space<vmem>>) attributes {dimension_semantics = [#tpu.dimension_semantics<parallel>], iteration_bounds = array<i64: 1>, scalar_prefetch = 0 : i64, scratch_operands = 0 : i64, tpu.core_type = #tpu.core_type<tc>, window_params = [{transform_indices = @transform_0, window_bounds = array<i64: 2, 4, 256>}, {pipeline_mode = #tpu.pipeline_mode<synchronous>, transform_indices = @transform_1, window_bounds = array<i64: 32, 512>}, {pipeline_mode = #tpu.pipeline_mode<synchronous>, transform_indices = @transform_2, window_bounds = array<i64: 288, 4>}, {pipeline_mode = #tpu.pipeline_mode<synchronous>, transform_indices = @transform_3, window_bounds = array<i64: 32, 1>}, {pipeline_mode = #tpu.pipeline_mode<synchronous>, transform_indices = @transform_4, window_bounds = array<i64: 4, 32>}, {pipeline_mode = #tpu.pipeline_mode<synchronous>, transform_indices = @transform_5, window_bounds = array<i64: 4, 1>}, {transform_indices = @transform_6, window_bounds = array<i64: 2, 4, 256>}]} {
    %c0 = arith.constant 0 : index
    %c0_0 = arith.constant 0 : index
    %c0_1 = arith.constant 0 : index
    %0 = vector.load %arg1[%c0, %c0_0, %c0_1] : memref<2x4x256xf32, #tpu.memory_space<vmem>>, vector<1x4x256xf32>
    %1 = vector.shape_cast %0 : vector<1x4x256xf32> to vector<4x256xf32>
    %c1 = arith.constant 1 : index
    %c0_2 = arith.constant 0 : index
    %c0_3 = arith.constant 0 : index
    %2 = vector.load %arg1[%c1, %c0_2, %c0_3] : memref<2x4x256xf32, #tpu.memory_space<vmem>>, vector<1x4x256xf32>
    %3 = vector.shape_cast %2 : vector<1x4x256xf32> to vector<4x256xf32>
    %4 = tpu.concatenate %1, %3 in 1 : vector<4x256xf32>, vector<4x256xf32> -> vector<4x512xf32>
    %c0_4 = arith.constant 0 : index
    %c0_5 = arith.constant 0 : index
    %5 = vector.load %arg3[%c0_4, %c0_5] : memref<288x4xf32, #tpu.memory_space<vmem>>, vector<288x4xf32>
    %cst = arith.constant dense<0.000000e+00> : vector<288x512xf32>
    %6 = tpu.matmul %5, %4, %cst {dimension_numbers = #tpu.dot_dimension_numbers<[1], [0], [0], [1], [0, 0, 1, 1], [], []>} : vector<288x4xf32>, vector<4x512xf32>, vector<288x512xf32> -> vector<288x512xf32>
    %7 = vector.extract_strided_slice %6 {offsets = [0, 0], sizes = [8, 512], strides = [1, 1]} : vector<288x512xf32> to vector<8x512xf32>
    %c34_i32 = arith.constant 34 : i32
    %8 = tpu.dynamic_rotate %7 by %c34_i32 dim 1 : vector<8x512xf32>, i32 -> vector<8x512xf32>
    %c0_6 = arith.constant 0 : index
    %c0_7 = arith.constant 0 : index
    %9 = vector.load %arg2[%c0_6, %c0_7] : memref<32x512xf32, #tpu.memory_space<vmem>>, vector<1x512xf32>
    %10 = vector.broadcast %9 : vector<1x512xf32> to vector<8x512xf32>
    %11 = arith.mulf %8, %10 : vector<8x512xf32>
    %12 = vector.extract_strided_slice %6 {offsets = [8, 0], sizes = [8, 512], strides = [1, 1]} : vector<288x512xf32> to vector<8x512xf32>
    %c32_i32 = arith.constant 32 : i32
    %13 = tpu.dynamic_rotate %12 by %c32_i32 dim 1 : vector<8x512xf32>, i32 -> vector<8x512xf32>
    %c1_8 = arith.constant 1 : index
    %c0_9 = arith.constant 0 : index
    %14 = vector.load %arg2[%c1_8, %c0_9] : memref<32x512xf32, #tpu.memory_space<vmem>>, vector<1x512xf32>
    %15 = vector.broadcast %14 : vector<1x512xf32> to vector<8x512xf32>
    %16 = arith.mulf %13, %15 : vector<8x512xf32>
    %17 = arith.addf %11, %16 : vector<8x512xf32>
    %18 = vector.extract_strided_slice %6 {offsets = [16, 0], sizes = [8, 512], strides = [1, 1]} : vector<288x512xf32> to vector<8x512xf32>
    %c30_i32 = arith.constant 30 : i32
    %19 = tpu.dynamic_rotate %18 by %c30_i32 dim 1 : vector<8x512xf32>, i32 -> vector<8x512xf32>
    %c2 = arith.constant 2 : index
    %c0_10 = arith.constant 0 : index
    %20 = vector.load %arg2[%c2, %c0_10] : memref<32x512xf32, #tpu.memory_space<vmem>>, vector<1x512xf32>
    %21 = vector.broadcast %20 : vector<1x512xf32> to vector<8x512xf32>
    %22 = arith.mulf %19, %21 : vector<8x512xf32>
    %23 = arith.addf %17, %22 : vector<8x512xf32>
    %24 = vector.extract_strided_slice %6 {offsets = [24, 0], sizes = [8, 512], strides = [1, 1]} : vector<288x512xf32> to vector<8x512xf32>
    %c2_i32 = arith.constant 2 : i32
    %25 = tpu.dynamic_rotate %24 by %c2_i32 dim 1 : vector<8x512xf32>, i32 -> vector<8x512xf32>
    %c3 = arith.constant 3 : index
    %c0_11 = arith.constant 0 : index
    %26 = vector.load %arg2[%c3, %c0_11] : memref<32x512xf32, #tpu.memory_space<vmem>>, vector<1x512xf32>
    %27 = vector.broadcast %26 : vector<1x512xf32> to vector<8x512xf32>
    %28 = arith.mulf %25, %27 : vector<8x512xf32>
    %29 = arith.addf %23, %28 : vector<8x512xf32>
    %30 = vector.extract_strided_slice %6 {offsets = [32, 0], sizes = [8, 512], strides = [1, 1]} : vector<288x512xf32> to vector<8x512xf32>
    %31 = arith.addf %29, %30 : vector<8x512xf32>
    %32 = vector.extract_strided_slice %6 {offsets = [40, 0], sizes = [8, 512], strides = [1, 1]} : vector<288x512xf32> to vector<8x512xf32>
    %c510_i32 = arith.constant 510 : i32
    %33 = tpu.dynamic_rotate %32 by %c510_i32 dim 1 : vector<8x512xf32>, i32 -> vector<8x512xf32>
    %c4 = arith.constant 4 : index
    %c0_12 = arith.constant 0 : index
    %34 = vector.load %arg2[%c4, %c0_12] : memref<32x512xf32, #tpu.memory_space<vmem>>, vector<1x512xf32>
    %35 = vector.broadcast %34 : vector<1x512xf32> to vector<8x512xf32>
    %36 = arith.mulf %33, %35 : vector<8x512xf32>
    %37 = arith.addf %31, %36 : vector<8x512xf32>
    %38 = vector.extract_strided_slice %6 {offsets = [48, 0], sizes = [8, 512], strides = [1, 1]} : vector<288x512xf32> to vector<8x512xf32>
    %c482_i32 = arith.constant 482 : i32
    %39 = tpu.dynamic_rotate %38 by %c482_i32 dim 1 : vector<8x512xf32>, i32 -> vector<8x512xf32>
    %c5 = arith.constant 5 : index
    %c0_13 = arith.constant 0 : index
    %40 = vector.load %arg2[%c5, %c0_13] : memref<32x512xf32, #tpu.memory_space<vmem>>, vector<1x512xf32>
    %41 = vector.broadcast %40 : vector<1x512xf32> to vector<8x512xf32>
    %42 = arith.mulf %39, %41 : vector<8x512xf32>
    %43 = arith.addf %37, %42 : vector<8x512xf32>
    %44 = vector.extract_strided_slice %6 {offsets = [56, 0], sizes = [8, 512], strides = [1, 1]} : vector<288x512xf32> to vector<8x512xf32>
    %c480_i32 = arith.constant 480 : i32
    %45 = tpu.dynamic_rotate %44 by %c480_i32 dim 1 : vector<8x512xf32>, i32 -> vector<8x512xf32>
    %c6 = arith.constant 6 : index
    %c0_14 = arith.constant 0 : index
    %46 = vector.load %arg2[%c6, %c0_14] : memref<32x512xf32, #tpu.memory_space<vmem>>, vector<1x512xf32>
    %47 = vector.broadcast %46 : vector<1x512xf32> to vector<8x512xf32>
    %48 = arith.mulf %45, %47 : vector<8x512xf32>
    %49 = arith.addf %43, %48 : vector<8x512xf32>
    %50 = vector.extract_strided_slice %6 {offsets = [64, 0], sizes = [8, 512], strides = [1, 1]} : vector<288x512xf32> to vector<8x512xf32>
    %c478_i32 = arith.constant 478 : i32
    %51 = tpu.dynamic_rotate %50 by %c478_i32 dim 1 : vector<8x512xf32>, i32 -> vector<8x512xf32>
    %c7 = arith.constant 7 : index
    %c0_15 = arith.constant 0 : index
    %52 = vector.load %arg2[%c7, %c0_15] : memref<32x512xf32, #tpu.memory_space<vmem>>, vector<1x512xf32>
    %53 = vector.broadcast %52 : vector<1x512xf32> to vector<8x512xf32>
    %54 = arith.mulf %51, %53 : vector<8x512xf32>
    %55 = arith.addf %49, %54 : vector<8x512xf32>
    %c0_16 = arith.constant 0 : index
    %c0_17 = arith.constant 0 : index
    %56 = vector.load %arg4[%c0_16, %c0_17] : memref<32x1xf32, #tpu.memory_space<vmem>>, vector<8x1xf32>
    %57 = vector.broadcast %56 : vector<8x1xf32> to vector<8x512xf32>
    %58 = arith.addf %55, %57 : vector<8x512xf32>
    %cst_18 = arith.constant 0.000000e+00 : f32
    %59 = vector.broadcast %cst_18 : f32 to vector<8x512xf32>
    %60 = arith.maximumf %58, %59 : vector<8x512xf32>
    %61 = vector.extract_strided_slice %6 {offsets = [72, 0], sizes = [8, 512], strides = [1, 1]} : vector<288x512xf32> to vector<8x512xf32>
    %c68_i32 = arith.constant 68 : i32
    %62 = tpu.dynamic_rotate %61 by %c68_i32 dim 1 : vector<8x512xf32>, i32 -> vector<8x512xf32>
    %c8 = arith.constant 8 : index
    %c0_19 = arith.constant 0 : index
    %63 = vector.load %arg2[%c8, %c0_19] : memref<32x512xf32, #tpu.memory_space<vmem>>, vector<1x512xf32>
    %64 = vector.broadcast %63 : vector<1x512xf32> to vector<8x512xf32>
    %65 = arith.mulf %62, %64 : vector<8x512xf32>
    %66 = vector.extract_strided_slice %6 {offsets = [80, 0], sizes = [8, 512], strides = [1, 1]} : vector<288x512xf32> to vector<8x512xf32>
    %c64_i32 = arith.constant 64 : i32
    %67 = tpu.dynamic_rotate %66 by %c64_i32 dim 1 : vector<8x512xf32>, i32 -> vector<8x512xf32>
    %c9 = arith.constant 9 : index
    %c0_20 = arith.constant 0 : index
    %68 = vector.load %arg2[%c9, %c0_20] : memref<32x512xf32, #tpu.memory_space<vmem>>, vector<1x512xf32>
    %69 = vector.broadcast %68 : vector<1x512xf32> to vector<8x512xf32>
    %70 = arith.mulf %67, %69 : vector<8x512xf32>
    %71 = arith.addf %65, %70 : vector<8x512xf32>
    %72 = vector.extract_strided_slice %6 {offsets = [88, 0], sizes = [8, 512], strides = [1, 1]} : vector<288x512xf32> to vector<8x512xf32>
    %c60_i32 = arith.constant 60 : i32
    %73 = tpu.dynamic_rotate %72 by %c60_i32 dim 1 : vector<8x512xf32>, i32 -> vector<8x512xf32>
    %c10 = arith.constant 10 : index
    %c0_21 = arith.constant 0 : index
    %74 = vector.load %arg2[%c10, %c0_21] : memref<32x512xf32, #tpu.memory_space<vmem>>, vector<1x512xf32>
    %75 = vector.broadcast %74 : vector<1x512xf32> to vector<8x512xf32>
    %76 = arith.mulf %73, %75 : vector<8x512xf32>
    %77 = arith.addf %71, %76 : vector<8x512xf32>
    %78 = vector.extract_strided_slice %6 {offsets = [96, 0], sizes = [8, 512], strides = [1, 1]} : vector<288x512xf32> to vector<8x512xf32>
    %c4_i32 = arith.constant 4 : i32
    %79 = tpu.dynamic_rotate %78 by %c4_i32 dim 1 : vector<8x512xf32>, i32 -> vector<8x512xf32>
    %c11 = arith.constant 11 : index
    %c0_22 = arith.constant 0 : index
    %80 = vector.load %arg2[%c11, %c0_22] : memref<32x512xf32, #tpu.memory_space<vmem>>, vector<1x512xf32>
    %81 = vector.broadcast %80 : vector<1x512xf32> to vector<8x512xf32>
    %82 = arith.mulf %79, %81 : vector<8x512xf32>
    %83 = arith.addf %77, %82 : vector<8x512xf32>
    %84 = vector.extract_strided_slice %6 {offsets = [104, 0], sizes = [8, 512], strides = [1, 1]} : vector<288x512xf32> to vector<8x512xf32>
    %85 = arith.addf %83, %84 : vector<8x512xf32>
    %86 = vector.extract_strided_slice %6 {offsets = [112, 0], sizes = [8, 512], strides = [1, 1]} : vector<288x512xf32> to vector<8x512xf32>
    %c508_i32 = arith.constant 508 : i32
    %87 = tpu.dynamic_rotate %86 by %c508_i32 dim 1 : vector<8x512xf32>, i32 -> vector<8x512xf32>
    %c12 = arith.constant 12 : index
    %c0_23 = arith.constant 0 : index
    %88 = vector.load %arg2[%c12, %c0_23] : memref<32x512xf32, #tpu.memory_space<vmem>>, vector<1x512xf32>
    %89 = vector.broadcast %88 : vector<1x512xf32> to vector<8x512xf32>
    %90 = arith.mulf %87, %89 : vector<8x512xf32>
    %91 = arith.addf %85, %90 : vector<8x512xf32>
    %92 = vector.extract_strided_slice %6 {offsets = [120, 0], sizes = [8, 512], strides = [1, 1]} : vector<288x512xf32> to vector<8x512xf32>
    %c452_i32 = arith.constant 452 : i32
    %93 = tpu.dynamic_rotate %92 by %c452_i32 dim 1 : vector<8x512xf32>, i32 -> vector<8x512xf32>
    %c13 = arith.constant 13 : index
    %c0_24 = arith.constant 0 : index
    %94 = vector.load %arg2[%c13, %c0_24] : memref<32x512xf32, #tpu.memory_space<vmem>>, vector<1x512xf32>
    %95 = vector.broadcast %94 : vector<1x512xf32> to vector<8x512xf32>
    %96 = arith.mulf %93, %95 : vector<8x512xf32>
    %97 = arith.addf %91, %96 : vector<8x512xf32>
    %98 = vector.extract_strided_slice %6 {offsets = [128, 0], sizes = [8, 512], strides = [1, 1]} : vector<288x512xf32> to vector<8x512xf32>
    %c448_i32 = arith.constant 448 : i32
    %99 = tpu.dynamic_rotate %98 by %c448_i32 dim 1 : vector<8x512xf32>, i32 -> vector<8x512xf32>
    %c14 = arith.constant 14 : index
    %c0_25 = arith.constant 0 : index
    %100 = vector.load %arg2[%c14, %c0_25] : memref<32x512xf32, #tpu.memory_space<vmem>>, vector<1x512xf32>
    %101 = vector.broadcast %100 : vector<1x512xf32> to vector<8x512xf32>
    %102 = arith.mulf %99, %101 : vector<8x512xf32>
    %103 = arith.addf %97, %102 : vector<8x512xf32>
    %104 = vector.extract_strided_slice %6 {offsets = [136, 0], sizes = [8, 512], strides = [1, 1]} : vector<288x512xf32> to vector<8x512xf32>
    %c444_i32 = arith.constant 444 : i32
    %105 = tpu.dynamic_rotate %104 by %c444_i32 dim 1 : vector<8x512xf32>, i32 -> vector<8x512xf32>
    %c15 = arith.constant 15 : index
    %c0_26 = arith.constant 0 : index
    %106 = vector.load %arg2[%c15, %c0_26] : memref<32x512xf32, #tpu.memory_space<vmem>>, vector<1x512xf32>
    %107 = vector.broadcast %106 : vector<1x512xf32> to vector<8x512xf32>
    %108 = arith.mulf %105, %107 : vector<8x512xf32>
    %109 = arith.addf %103, %108 : vector<8x512xf32>
    %c8_27 = arith.constant 8 : index
    %c0_28 = arith.constant 0 : index
    %110 = vector.load %arg4[%c8_27, %c0_28] : memref<32x1xf32, #tpu.memory_space<vmem>>, vector<8x1xf32>
    %111 = vector.broadcast %110 : vector<8x1xf32> to vector<8x512xf32>
    %112 = arith.addf %109, %111 : vector<8x512xf32>
    %cst_29 = arith.constant 0.000000e+00 : f32
    %113 = vector.broadcast %cst_29 : f32 to vector<8x512xf32>
    %114 = arith.maximumf %112, %113 : vector<8x512xf32>
    %115 = vector.extract_strided_slice %6 {offsets = [144, 0], sizes = [8, 512], strides = [1, 1]} : vector<288x512xf32> to vector<8x512xf32>
    %c136_i32 = arith.constant 136 : i32
    %116 = tpu.dynamic_rotate %115 by %c136_i32 dim 1 : vector<8x512xf32>, i32 -> vector<8x512xf32>
    %c16 = arith.constant 16 : index
    %c0_30 = arith.constant 0 : index
    %117 = vector.load %arg2[%c16, %c0_30] : memref<32x512xf32, #tpu.memory_space<vmem>>, vector<1x512xf32>
    %118 = vector.broadcast %117 : vector<1x512xf32> to vector<8x512xf32>
    %119 = arith.mulf %116, %118 : vector<8x512xf32>
    %120 = vector.extract_strided_slice %6 {offsets = [152, 0], sizes = [8, 512], strides = [1, 1]} : vector<288x512xf32> to vector<8x512xf32>
    %c128_i32 = arith.constant 128 : i32
    %121 = tpu.dynamic_rotate %120 by %c128_i32 dim 1 : vector<8x512xf32>, i32 -> vector<8x512xf32>
    %c17 = arith.constant 17 : index
    %c0_31 = arith.constant 0 : index
    %122 = vector.load %arg2[%c17, %c0_31] : memref<32x512xf32, #tpu.memory_space<vmem>>, vector<1x512xf32>
    %123 = vector.broadcast %122 : vector<1x512xf32> to vector<8x512xf32>
    %124 = arith.mulf %121, %123 : vector<8x512xf32>
    %125 = arith.addf %119, %124 : vector<8x512xf32>
    %126 = vector.extract_strided_slice %6 {offsets = [160, 0], sizes = [8, 512], strides = [1, 1]} : vector<288x512xf32> to vector<8x512xf32>
    %c120_i32 = arith.constant 120 : i32
    %127 = tpu.dynamic_rotate %126 by %c120_i32 dim 1 : vector<8x512xf32>, i32 -> vector<8x512xf32>
    %c18 = arith.constant 18 : index
    %c0_32 = arith.constant 0 : index
    %128 = vector.load %arg2[%c18, %c0_32] : memref<32x512xf32, #tpu.memory_space<vmem>>, vector<1x512xf32>
    %129 = vector.broadcast %128 : vector<1x512xf32> to vector<8x512xf32>
    %130 = arith.mulf %127, %129 : vector<8x512xf32>
    %131 = arith.addf %125, %130 : vector<8x512xf32>
    %132 = vector.extract_strided_slice %6 {offsets = [168, 0], sizes = [8, 512], strides = [1, 1]} : vector<288x512xf32> to vector<8x512xf32>
    %c8_i32 = arith.constant 8 : i32
    %133 = tpu.dynamic_rotate %132 by %c8_i32 dim 1 : vector<8x512xf32>, i32 -> vector<8x512xf32>
    %c19 = arith.constant 19 : index
    %c0_33 = arith.constant 0 : index
    %134 = vector.load %arg2[%c19, %c0_33] : memref<32x512xf32, #tpu.memory_space<vmem>>, vector<1x512xf32>
    %135 = vector.broadcast %134 : vector<1x512xf32> to vector<8x512xf32>
    %136 = arith.mulf %133, %135 : vector<8x512xf32>
    %137 = arith.addf %131, %136 : vector<8x512xf32>
    %138 = vector.extract_strided_slice %6 {offsets = [176, 0], sizes = [8, 512], strides = [1, 1]} : vector<288x512xf32> to vector<8x512xf32>
    %139 = arith.addf %137, %138 : vector<8x512xf32>
    %140 = vector.extract_strided_slice %6 {offsets = [184, 0], sizes = [8, 512], strides = [1, 1]} : vector<288x512xf32> to vector<8x512xf32>
    %c504_i32 = arith.constant 504 : i32
    %141 = tpu.dynamic_rotate %140 by %c504_i32 dim 1 : vector<8x512xf32>, i32 -> vector<8x512xf32>
    %c20 = arith.constant 20 : index
    %c0_34 = arith.constant 0 : index
    %142 = vector.load %arg2[%c20, %c0_34] : memref<32x512xf32, #tpu.memory_space<vmem>>, vector<1x512xf32>
    %143 = vector.broadcast %142 : vector<1x512xf32> to vector<8x512xf32>
    %144 = arith.mulf %141, %143 : vector<8x512xf32>
    %145 = arith.addf %139, %144 : vector<8x512xf32>
    %146 = vector.extract_strided_slice %6 {offsets = [192, 0], sizes = [8, 512], strides = [1, 1]} : vector<288x512xf32> to vector<8x512xf32>
    %c392_i32 = arith.constant 392 : i32
    %147 = tpu.dynamic_rotate %146 by %c392_i32 dim 1 : vector<8x512xf32>, i32 -> vector<8x512xf32>
    %c21 = arith.constant 21 : index
    %c0_35 = arith.constant 0 : index
    %148 = vector.load %arg2[%c21, %c0_35] : memref<32x512xf32, #tpu.memory_space<vmem>>, vector<1x512xf32>
    %149 = vector.broadcast %148 : vector<1x512xf32> to vector<8x512xf32>
    %150 = arith.mulf %147, %149 : vector<8x512xf32>
    %151 = arith.addf %145, %150 : vector<8x512xf32>
    %152 = vector.extract_strided_slice %6 {offsets = [200, 0], sizes = [8, 512], strides = [1, 1]} : vector<288x512xf32> to vector<8x512xf32>
    %c384_i32 = arith.constant 384 : i32
    %153 = tpu.dynamic_rotate %152 by %c384_i32 dim 1 : vector<8x512xf32>, i32 -> vector<8x512xf32>
    %c22 = arith.constant 22 : index
    %c0_36 = arith.constant 0 : index
    %154 = vector.load %arg2[%c22, %c0_36] : memref<32x512xf32, #tpu.memory_space<vmem>>, vector<1x512xf32>
    %155 = vector.broadcast %154 : vector<1x512xf32> to vector<8x512xf32>
    %156 = arith.mulf %153, %155 : vector<8x512xf32>
    %157 = arith.addf %151, %156 : vector<8x512xf32>
    %158 = vector.extract_strided_slice %6 {offsets = [208, 0], sizes = [8, 512], strides = [1, 1]} : vector<288x512xf32> to vector<8x512xf32>
    %c376_i32 = arith.constant 376 : i32
    %159 = tpu.dynamic_rotate %158 by %c376_i32 dim 1 : vector<8x512xf32>, i32 -> vector<8x512xf32>
    %c23 = arith.constant 23 : index
    %c0_37 = arith.constant 0 : index
    %160 = vector.load %arg2[%c23, %c0_37] : memref<32x512xf32, #tpu.memory_space<vmem>>, vector<1x512xf32>
    %161 = vector.broadcast %160 : vector<1x512xf32> to vector<8x512xf32>
    %162 = arith.mulf %159, %161 : vector<8x512xf32>
    %163 = arith.addf %157, %162 : vector<8x512xf32>
    %c16_38 = arith.constant 16 : index
    %c0_39 = arith.constant 0 : index
    %164 = vector.load %arg4[%c16_38, %c0_39] : memref<32x1xf32, #tpu.memory_space<vmem>>, vector<8x1xf32>
    %165 = vector.broadcast %164 : vector<8x1xf32> to vector<8x512xf32>
    %166 = arith.addf %163, %165 : vector<8x512xf32>
    %cst_40 = arith.constant 0.000000e+00 : f32
    %167 = vector.broadcast %cst_40 : f32 to vector<8x512xf32>
    %168 = arith.maximumf %166, %167 : vector<8x512xf32>
    %169 = vector.extract_strided_slice %6 {offsets = [216, 0], sizes = [8, 512], strides = [1, 1]} : vector<288x512xf32> to vector<8x512xf32>
    %c204_i32 = arith.constant 204 : i32
    %170 = tpu.dynamic_rotate %169 by %c204_i32 dim 1 : vector<8x512xf32>, i32 -> vector<8x512xf32>
    %c24 = arith.constant 24 : index
    %c0_41 = arith.constant 0 : index
    %171 = vector.load %arg2[%c24, %c0_41] : memref<32x512xf32, #tpu.memory_space<vmem>>, vector<1x512xf32>
    %172 = vector.broadcast %171 : vector<1x512xf32> to vector<8x512xf32>
    %173 = arith.mulf %170, %172 : vector<8x512xf32>
    %174 = vector.extract_strided_slice %6 {offsets = [224, 0], sizes = [8, 512], strides = [1, 1]} : vector<288x512xf32> to vector<8x512xf32>
    %c192_i32 = arith.constant 192 : i32
    %175 = tpu.dynamic_rotate %174 by %c192_i32 dim 1 : vector<8x512xf32>, i32 -> vector<8x512xf32>
    %c25 = arith.constant 25 : index
    %c0_42 = arith.constant 0 : index
    %176 = vector.load %arg2[%c25, %c0_42] : memref<32x512xf32, #tpu.memory_space<vmem>>, vector<1x512xf32>
    %177 = vector.broadcast %176 : vector<1x512xf32> to vector<8x512xf32>
    %178 = arith.mulf %175, %177 : vector<8x512xf32>
    %179 = arith.addf %173, %178 : vector<8x512xf32>
    %180 = vector.extract_strided_slice %6 {offsets = [232, 0], sizes = [8, 512], strides = [1, 1]} : vector<288x512xf32> to vector<8x512xf32>
    %c180_i32 = arith.constant 180 : i32
    %181 = tpu.dynamic_rotate %180 by %c180_i32 dim 1 : vector<8x512xf32>, i32 -> vector<8x512xf32>
    %c26 = arith.constant 26 : index
    %c0_43 = arith.constant 0 : index
    %182 = vector.load %arg2[%c26, %c0_43] : memref<32x512xf32, #tpu.memory_space<vmem>>, vector<1x512xf32>
    %183 = vector.broadcast %182 : vector<1x512xf32> to vector<8x512xf32>
    %184 = arith.mulf %181, %183 : vector<8x512xf32>
    %185 = arith.addf %179, %184 : vector<8x512xf32>
    %186 = vector.extract_strided_slice %6 {offsets = [240, 0], sizes = [8, 512], strides = [1, 1]} : vector<288x512xf32> to vector<8x512xf32>
    %c12_i32 = arith.constant 12 : i32
    %187 = tpu.dynamic_rotate %186 by %c12_i32 dim 1 : vector<8x512xf32>, i32 -> vector<8x512xf32>
    %c27 = arith.constant 27 : index
    %c0_44 = arith.constant 0 : index
    %188 = vector.load %arg2[%c27, %c0_44] : memref<32x512xf32, #tpu.memory_space<vmem>>, vector<1x512xf32>
    %189 = vector.broadcast %188 : vector<1x512xf32> to vector<8x512xf32>
    %190 = arith.mulf %187, %189 : vector<8x512xf32>
    %191 = arith.addf %185, %190 : vector<8x512xf32>
    %192 = vector.extract_strided_slice %6 {offsets = [248, 0], sizes = [8, 512], strides = [1, 1]} : vector<288x512xf32> to vector<8x512xf32>
    %193 = arith.addf %191, %192 : vector<8x512xf32>
    %194 = vector.extract_strided_slice %6 {offsets = [256, 0], sizes = [8, 512], strides = [1, 1]} : vector<288x512xf32> to vector<8x512xf32>
    %c500_i32 = arith.constant 500 : i32
    %195 = tpu.dynamic_rotate %194 by %c500_i32 dim 1 : vector<8x512xf32>, i32 -> vector<8x512xf32>
    %c28 = arith.constant 28 : index
    %c0_45 = arith.constant 0 : index
    %196 = vector.load %arg2[%c28, %c0_45] : memref<32x512xf32, #tpu.memory_space<vmem>>, vector<1x512xf32>
    %197 = vector.broadcast %196 : vector<1x512xf32> to vector<8x512xf32>
    %198 = arith.mulf %195, %197 : vector<8x512xf32>
    %199 = arith.addf %193, %198 : vector<8x512xf32>
    %200 = vector.extract_strided_slice %6 {offsets = [264, 0], sizes = [8, 512], strides = [1, 1]} : vector<288x512xf32> to vector<8x512xf32>
    %c332_i32 = arith.constant 332 : i32
    %201 = tpu.dynamic_rotate %200 by %c332_i32 dim 1 : vector<8x512xf32>, i32 -> vector<8x512xf32>
    %c29 = arith.constant 29 : index
    %c0_46 = arith.constant 0 : index
    %202 = vector.load %arg2[%c29, %c0_46] : memref<32x512xf32, #tpu.memory_space<vmem>>, vector<1x512xf32>
    %203 = vector.broadcast %202 : vector<1x512xf32> to vector<8x512xf32>
    %204 = arith.mulf %201, %203 : vector<8x512xf32>
    %205 = arith.addf %199, %204 : vector<8x512xf32>
    %206 = vector.extract_strided_slice %6 {offsets = [272, 0], sizes = [8, 512], strides = [1, 1]} : vector<288x512xf32> to vector<8x512xf32>
    %c320_i32 = arith.constant 320 : i32
    %207 = tpu.dynamic_rotate %206 by %c320_i32 dim 1 : vector<8x512xf32>, i32 -> vector<8x512xf32>
    %c30 = arith.constant 30 : index
    %c0_47 = arith.constant 0 : index
    %208 = vector.load %arg2[%c30, %c0_47] : memref<32x512xf32, #tpu.memory_space<vmem>>, vector<1x512xf32>
    %209 = vector.broadcast %208 : vector<1x512xf32> to vector<8x512xf32>
    %210 = arith.mulf %207, %209 : vector<8x512xf32>
    %211 = arith.addf %205, %210 : vector<8x512xf32>
    %212 = vector.extract_strided_slice %6 {offsets = [280, 0], sizes = [8, 512], strides = [1, 1]} : vector<288x512xf32> to vector<8x512xf32>
    %c308_i32 = arith.constant 308 : i32
    %213 = tpu.dynamic_rotate %212 by %c308_i32 dim 1 : vector<8x512xf32>, i32 -> vector<8x512xf32>
    %c31 = arith.constant 31 : index
    %c0_48 = arith.constant 0 : index
    %214 = vector.load %arg2[%c31, %c0_48] : memref<32x512xf32, #tpu.memory_space<vmem>>, vector<1x512xf32>
    %215 = vector.broadcast %214 : vector<1x512xf32> to vector<8x512xf32>
    %216 = arith.mulf %213, %215 : vector<8x512xf32>
    %217 = arith.addf %211, %216 : vector<8x512xf32>
    %c24_49 = arith.constant 24 : index
    %c0_50 = arith.constant 0 : index
    %218 = vector.load %arg4[%c24_49, %c0_50] : memref<32x1xf32, #tpu.memory_space<vmem>>, vector<8x1xf32>
    %219 = vector.broadcast %218 : vector<8x1xf32> to vector<8x512xf32>
    %220 = arith.addf %217, %219 : vector<8x512xf32>
    %cst_51 = arith.constant 0.000000e+00 : f32
    %221 = vector.broadcast %cst_51 : f32 to vector<8x512xf32>
    %222 = arith.maximumf %220, %221 : vector<8x512xf32>
    %223 = tpu.concatenate %60, %114, %168, %222 in 0 : vector<8x512xf32>, vector<8x512xf32>, vector<8x512xf32>, vector<8x512xf32> -> vector<32x512xf32>
    %c0_52 = arith.constant 0 : index
    %c0_53 = arith.constant 0 : index
    %224 = vector.load %arg5[%c0_52, %c0_53] : memref<4x32xf32, #tpu.memory_space<vmem>>, vector<4x32xf32>
    %cst_54 = arith.constant dense<0.000000e+00> : vector<4x512xf32>
    %225 = tpu.matmul %224, %223, %cst_54 {dimension_numbers = #tpu.dot_dimension_numbers<[1], [0], [0], [1], [0, 0, 1, 1], [], []>} : vector<4x32xf32>, vector<32x512xf32>, vector<4x512xf32> -> vector<4x512xf32>
    %c0_55 = arith.constant 0 : index
    %c0_56 = arith.constant 0 : index
    %226 = vector.load %arg6[%c0_55, %c0_56] : memref<4x1xf32, #tpu.memory_space<vmem>>, vector<4x1xf32>
    %227 = vector.broadcast %226 : vector<4x1xf32> to vector<4x512xf32>
    %228 = arith.addf %225, %227 : vector<4x512xf32>
    %cst_57 = arith.constant 0.000000e+00 : f32
    %229 = vector.broadcast %cst_57 : f32 to vector<4x512xf32>
    %230 = arith.maximumf %228, %229 : vector<4x512xf32>
    %231 = vector.extract_strided_slice %230 {offsets = [0, 0], sizes = [4, 256], strides = [1, 1]} : vector<4x512xf32> to vector<4x256xf32>
    %c0_58 = arith.constant 0 : index
    %c0_59 = arith.constant 0 : index
    %c0_60 = arith.constant 0 : index
    %232 = vector.load %arg7[%c0_58, %c0_59, %c0_60] : memref<2x4x256xf32, #tpu.memory_space<vmem>>, vector<1x4x256xf32>
    %233 = vector.shape_cast %232 : vector<1x4x256xf32> to vector<4x256xf32>
    %234 = vector.shape_cast %231 : vector<4x256xf32> to vector<1x4x256xf32>
    tpu.vector_store %arg7[%c0_58, %c0_59, %c0_60], %234 {strides = array<i32>} : memref<2x4x256xf32, #tpu.memory_space<vmem>>, vector<1x4x256xf32>,
    %235 = vector.extract_strided_slice %230 {offsets = [0, 256], sizes = [4, 256], strides = [1, 1]} : vector<4x512xf32> to vector<4x256xf32>
    %c1_61 = arith.constant 1 : index
    %c0_62 = arith.constant 0 : index
    %c0_63 = arith.constant 0 : index
    %236 = vector.load %arg7[%c1_61, %c0_62, %c0_63] : memref<2x4x256xf32, #tpu.memory_space<vmem>>, vector<1x4x256xf32>
    %237 = vector.shape_cast %236 : vector<1x4x256xf32> to vector<4x256xf32>
    %238 = vector.shape_cast %235 : vector<4x256xf32> to vector<1x4x256xf32>
    tpu.vector_store %arg7[%c1_61, %c0_62, %c0_63], %238 {strides = array<i32>} : memref<2x4x256xf32, #tpu.memory_space<vmem>>, vector<1x4x256xf32>,
    return
  }
  func.func @transform_0(%arg0: i32) -> (i32, i32, i32) {
    %c0_i32 = arith.constant 0 : i32
    %c0_i32_0 = arith.constant 0 : i32
    %c0_i32_1 = arith.constant 0 : i32
    return %arg0, %c0_i32, %c0_i32_0 : i32, i32, i32
  }
  func.func @transform_1(%arg0: i32) -> (i32, i32) {
    %c0_i32 = arith.constant 0 : i32
    %c0_i32_0 = arith.constant 0 : i32
    %c0_i32_1 = arith.constant 0 : i32
    return %c0_i32, %c0_i32_0 : i32, i32
  }
  func.func @transform_2(%arg0: i32) -> (i32, i32) {
    %c0_i32 = arith.constant 0 : i32
    %c0_i32_0 = arith.constant 0 : i32
    %c0_i32_1 = arith.constant 0 : i32
    return %c0_i32, %c0_i32_0 : i32, i32
  }
  func.func @transform_3(%arg0: i32) -> (i32, i32) {
    %c0_i32 = arith.constant 0 : i32
    %c0_i32_0 = arith.constant 0 : i32
    %c0_i32_1 = arith.constant 0 : i32
    return %c0_i32, %c0_i32_0 : i32, i32
  }
  func.func @transform_4(%arg0: i32) -> (i32, i32) {
    %c0_i32 = arith.constant 0 : i32
    %c0_i32_0 = arith.constant 0 : i32
    %c0_i32_1 = arith.constant 0 : i32
    return %c0_i32, %c0_i32_0 : i32, i32
  }
  func.func @transform_5(%arg0: i32) -> (i32, i32) {
    %c0_i32 = arith.constant 0 : i32
    %c0_i32_0 = arith.constant 0 : i32
    %c0_i32_1 = arith.constant 0 : i32
    return %c0_i32, %c0_i32_0 : i32, i32
  }
  func.func @transform_6(%arg0: i32) -> (i32, i32, i32) {
    %c0_i32 = arith.constant 0 : i32
    %c0_i32_0 = arith.constant 0 : i32
    %c0_i32_1 = arith.constant 0 : i32
    return %arg0, %c0_i32, %c0_i32_0 : i32, i32, i32
  }
}

</mosaic_0001>

<llo_original>
// kernel: forward.1
$region0: #{forward.1}
  #allocation0 [shape = 'u32[]', space=smem, size = 0x4, offset = 0x4, fixed_abs, tag = 'smem constant byte address 0x4 - core index']
  #allocation1 [shape = 'u32[72,128]{1,0:T(1,128)}', space=vmem, size = 0x9000, scoped, tag = 'internal scratch']
  %s0 = inlined_call_operand.vmem [shape: f32[2,4,256], index: 0, kind: input, shape index: {}]
  %s1 = inlined_call_operand.vmem [shape: f32[32,512], index: 1, kind: input, shape index: {}]
  %s2 = inlined_call_operand.hbm [shape: f32[288,4], index: 2, kind: input, shape index: {}]
  %s3 = inlined_call_operand.hbm [shape: f32[32,1], index: 3, kind: input, shape index: {}]
  %s4 = inlined_call_operand.vmem [shape: f32[4,32], index: 4, kind: input, shape index: {}]
  %s5 = inlined_call_operand.vmem [shape: f32[4,1], index: 5, kind: input, shape index: {}]
  %s6 = inlined_call_operand.vmem [shape: f32[2,4,256], index: 6, kind: output, shape index: {}]
  %s7 = sld [smem:[#allocation0]]
  $region42: #{forward.1} parent=0
    _
  %s9 = ssub.s32 1, %s7
  %s10 = scalar_select 0, %s9, %s7
  $region1: #{forward.1} parent=0
    #allocation2 [shape = 'u8[147456]{0}', space=vmem, size = 0x24000, scoped, tag = 'input window, operand 2, single buffered']
    #allocation3 [shape = 's32[1]{0}', space=sflag, size = 0x4, scoped, tag = 'scoped memory for forward.1']
    #allocation4 [shape = 'u8[16384]{0}', space=vmem, size = 0x4000, scoped, tag = 'input window, operand 3, single buffered']
    #allocation5 [shape = 's32[1]{0}', space=sflag, size = 0x4, scoped, tag = 'scoped memory for forward.1']
    %11 = vsyncpa [#allocation3], 0
    %12 = vsyncpa [#allocation5], 0
    // Predicated region
    $region2: #{forward.1} parent=1 // pred_check
      _
    $region3: #{forward.1} parent=1 // pred_check_branch
      %14 = sbr.rel (0) target = $region5
    $region4: #{forward.1} parent=1 // pred_region
      _
    $region5: #{forward.1} parent=1 // pred_fallthru
      _
    // Predicated region
    $region6: #{forward.1} parent=1 // pred_check
      _
    $region7: #{forward.1} parent=1 // pred_check_branch
      %16 = sbr.rel (0) target = $region9
    $region8: #{forward.1} parent=1 // pred_region
      _
    $region9: #{forward.1} parent=1 // pred_fallthru
      _
    // Predicated region
    $region10: #{forward.1} parent=1 // pred_check
      _
    $region11: #{forward.1} parent=1 // pred_check_branch
      %18 = sbr.rel (0) target = $region13
    $region12: #{forward.1} parent=1 // pred_region
      %20 = vsyncadd [#allocation3], 0
      %s21 = sshll.u32 %s2, 4
      %s22 = int_to_ptr.hbm [resolvable:$true] %s21
      %s23 = sshll.u32 [#allocation2], 4
      %s24 = int_to_ptr.vmem [resolvable:$true] %s23
      %29 = dma.hbm_to_vmem [thread:$0]  %s22, 4608, %s24, [#allocation3], 128, 128, 8
    $region13: #{forward.1} parent=1 // pred_fallthru
      _
    // Predicated region
    $region14: #{forward.1} parent=1 // pred_check
      _
    $region15: #{forward.1} parent=1 // pred_check_branch
      %31 = sbr.rel (0) target = $region17
    $region16: #{forward.1} parent=1 // pred_region
      %33 = vsyncadd [#allocation5], 0
      %s34 = sshll.u32 %s3, 4
      %s35 = int_to_ptr.hbm [resolvable:$true] %s34
      %s36 = sshll.u32 [#allocation4], 4
      %s37 = int_to_ptr.vmem [resolvable:$true] %s36
      %42 = dma.hbm_to_vmem [thread:$0]  %s35, 512, %s37, [#allocation5], 128, 128, 8
    $region17: #{forward.1} parent=1 // pred_fallthru
      _
    // Predicated region
    $region18: #{forward.1} parent=1 // pred_check
      _
    $region19: #{forward.1} parent=1 // pred_check_branch
      %44 = sbr.rel (0) target = $region21
    $region20: #{forward.1} parent=1 // pred_region
      _
    $region21: #{forward.1} parent=1 // pred_fallthru
      _
    // Predicated region
    $region22: #{forward.1} parent=1 // pred_check
      _
    $region23: #{forward.1} parent=1 // pred_check_branch
      %46 = sbr.rel (0) target = $region25
    $region24: #{forward.1} parent=1 // pred_region
      _
    $region25: #{forward.1} parent=1 // pred_fallthru
      _
    // Predicated region
    $region26: #{forward.1} parent=1 // pred_check
      _
    $region27: #{forward.1} parent=1 // pred_check_branch
      %48 = sbr.rel (0) target = $region29
    $region28: #{forward.1} parent=1 // pred_region
      %50 = dma.done [#allocation3], 4608
    $region29: #{forward.1} parent=1 // pred_fallthru
      _
    // Predicated region
    $region30: #{forward.1} parent=1 // pred_check
      _
    $region31: #{forward.1} parent=1 // pred_check_branch
      %52 = sbr.rel (0) target = $region33
    $region32: #{forward.1} parent=1 // pred_region
      %54 = dma.done [#allocation5], 512
    $region33: #{forward.1} parent=1 // pred_fallthru
      _
    %v55 = vld [vmem:[%s0] sm:$0xff]
    %s56 = scalar_lea.vmem %s0, 8
    %v57 = vld [vmem:[%s56] sm:$0xff]
    %59 = vst [vmem:[#allocation1] ss:$2 sm:$0xff] %v55
    %v60 = vld.sshfl [vmem:[#allocation1] sm:$0xff pattern:$0x75316420]
    %v61 = vld.sshfl [vmem:[#allocation1 + $0x8] sm:$0xff pattern:$0x75316420]
    %63 = vst [vmem:[#allocation1] ss:$2 sm:$0xff] %v57
    %v64 = vld.sshfl [vmem:[#allocation1] sm:$0xff pattern:$0x75316420]
    %v65 = vld.sshfl [vmem:[#allocation1 + $0x8] sm:$0xff pattern:$0x75316420]
    %v66 = vld [vmem:[#allocation2] sm:$0xff]
    %v67 = vld [vmem:[#allocation2 + $0x8] sm:$0xff]
    %v68 = vld [vmem:[#allocation2 + $0x10] sm:$0xff]
    %v69 = vld [vmem:[#allocation2 + $0x18] sm:$0xff]
    %v70 = vld [vmem:[#allocation2 + $0x20] sm:$0xff]
    %v71 = vld [vmem:[#allocation2 + $0x28] sm:$0xff]
    %v72 = vld [vmem:[#allocation2 + $0x30] sm:$0xff]
    %v73 = vld [vmem:[#allocation2 + $0x38] sm:$0xff]
    %v74 = vld [vmem:[#allocation2 + $0x40] sm:$0xff]
    %v75 = vld [vmem:[#allocation2 + $0x48] sm:$0xff]
    %v76 = vld [vmem:[#allocation2 + $0x50] sm:$0xff]
    %v77 = vld [vmem:[#allocation2 + $0x58] sm:$0xff]
    %v78 = vld [vmem:[#allocation2 + $0x60] sm:$0xff]
    %v79 = vld [vmem:[#allocation2 + $0x68] sm:$0xff]
    %v80 = vld [vmem:[#allocation2 + $0x70] sm:$0xff]
    %v81 = vld [vmem:[#allocation2 + $0x78] sm:$0xff]
    %v82 = vld [vmem:[#allocation2 + $0x80] sm:$0xff]
    %v83 = vld [vmem:[#allocation2 + $0x88] sm:$0xff]
    %v84 = vld [vmem:[#allocation2 + $0x90] sm:$0xff]
    %v85 = vld [vmem:[#allocation2 + $0x98] sm:$0xff]
    %v86 = vld [vmem:[#allocation2 + $0xa0] sm:$0xff]
    %v87 = vld [vmem:[#allocation2 + $0xa8] sm:$0xff]
    %v88 = vld [vmem:[#allocation2 + $0xb0] sm:$0xff]
    %v89 = vld [vmem:[#allocation2 + $0xb8] sm:$0xff]
    %v90 = vld [vmem:[#allocation2 + $0xc0] sm:$0xff]
    %v91 = vld [vmem:[#allocation2 + $0xc8] sm:$0xff]
    %v92 = vld [vmem:[#allocation2 + $0xd0] sm:$0xff]
    %v93 = vld [vmem:[#allocation2 + $0xd8] sm:$0xff]
    %v94 = vld [vmem:[#allocation2 + $0xe0] sm:$0xff]
    %v95 = vld [vmem:[#allocation2 + $0xe8] sm:$0xff]
    %v96 = vld [vmem:[#allocation2 + $0xf0] sm:$0xff]
    %v97 = vld [vmem:[#allocation2 + $0xf8] sm:$0xff]
    %v98 = vld [vmem:[#allocation2 + $0x100] sm:$0xff]
    %v99 = vld [vmem:[#allocation2 + $0x108] sm:$0xff]
    %v100 = vld [vmem:[#allocation2 + $0x110] sm:$0xff]
    %v101 = vld [vmem:[#allocation2 + $0x118] sm:$0xff]
    %vm102 = vcmask 31744
    %v104 = vsel %vm102, %v66, 0
    %v107 = vsel %vm102, %v67, 0
    %v110 = vsel %vm102, %v68, 0
    %v113 = vsel %vm102, %v69, 0
    %v116 = vsel %vm102, %v70, 0
    %v119 = vsel %vm102, %v71, 0
    %v122 = vsel %vm102, %v72, 0
    %v125 = vsel %vm102, %v73, 0
    %v128 = vsel %vm102, %v74, 0
    %v131 = vsel %vm102, %v75, 0
    %v134 = vsel %vm102, %v76, 0
    %v137 = vsel %vm102, %v77, 0
    %v140 = vsel %vm102, %v78, 0
    %v143 = vsel %vm102, %v79, 0
    %v146 = vsel %vm102, %v80, 0
    %v149 = vsel %vm102, %v81, 0
    %v152 = vsel %vm102, %v82, 0
    %v155 = vsel %vm102, %v83, 0
    %v158 = vsel %vm102, %v84, 0
    %v161 = vsel %vm102, %v85, 0
    %v164 = vsel %vm102, %v86, 0
    %v167 = vsel %vm102, %v87, 0
    %v170 = vsel %vm102, %v88, 0
    %v173 = vsel %vm102, %v89, 0
    %v176 = vsel %vm102, %v90, 0
    %v179 = vsel %vm102, %v91, 0
    %v182 = vsel %vm102, %v92, 0
    %v185 = vsel %vm102, %v93, 0
    %v188 = vsel %vm102, %v94, 0
    %v191 = vsel %vm102, %v95, 0
    %v194 = vsel %vm102, %v96, 0
    %v197 = vsel %vm102, %v97, 0
    %v200 = vsel %vm102, %v98, 0
    %v203 = vsel %vm102, %v99, 0
    %v206 = vsel %vm102, %v100, 0
    %v209 = vsel %vm102, %v101, 0
    %vm211 = vcmask 1043456
    %v212 = vsel %vm211, %v60, 0
    %v214 = vsel %vm211, %v61, 0
    %v216 = vsel %vm211, %v64, 0
    %v218 = vsel %vm211, %v65, 0
    %220 = vmatpush.msra.mxu0 0.0
    %221 = vmatpush.msra.mxu0 0.0
    %222 = vmatpush.msra.mxu0 0.0
    %223 = vmatpush.msra.mxu0 0.0
    %224 = vmatpush.msra.mxu0 0.0
    %225 = vmatpush.msra.mxu0 0.0
    %226 = vmatpush.msra.mxu0 0.0
    %227 = vmatpush.msra.mxu0 0.0
    %228 = vmatpush.msra.mxu0 0.0
    %229 = vmatpush.msra.mxu0 0.0
    %230 = vmatpush.msra.mxu0 0.0
    %231 = vmatpush.msra.mxu0 0.0
    %232 = vmatpush.msra.mxu0 0.0
    %233 = vmatpush.msra.mxu0 0.0
    %234 = vmatpush.msra.mxu0 0.0
    %235 = vmatpush.msra.mxu0 %v212
    %236 = vmatmul.f32.gmra.mxu0 %v104
    %v237 = vpop.f32.mrf.mxu0
    %v238 = vadd.f32 0.0, %v237
    %239 = vmatmul.f32.gmra.mxu0 %v107
    %v240 = vpop.f32.mrf.mxu0
    %v241 = vadd.f32 0.0, %v240
    %242 = vmatmul.f32.gmra.mxu0 %v110
    %v243 = vpop.f32.mrf.mxu0
    %v244 = vadd.f32 0.0, %v243
    %245 = vmatmul.f32.gmra.mxu0 %v113
    %v246 = vpop.f32.mrf.mxu0
    %v247 = vadd.f32 0.0, %v246
    %248 = vmatmul.f32.gmra.mxu0 %v116
    %v249 = vpop.f32.mrf.mxu0
    %v250 = vadd.f32 0.0, %v249
    %251 = vmatmul.f32.gmra.mxu0 %v119
    %v252 = vpop.f32.mrf.mxu0
    %v253 = vadd.f32 0.0, %v252
    %254 = vmatmul.f32.gmra.mxu0 %v122
    %v255 = vpop.f32.mrf.mxu0
    %v256 = vadd.f32 0.0, %v255
    %257 = vmatmul.f32.gmra.mxu0 %v125
    %v258 = vpop.f32.mrf.mxu0
    %v259 = vadd.f32 0.0, %v258
    %260 = vmatmul.f32.gmra.mxu0 %v128
    %v261 = vpop.f32.mrf.mxu0
    %v262 = vadd.f32 0.0, %v261
    %263 = vmatmul.f32.gmra.mxu0 %v131
    %v264 = vpop.f32.mrf.mxu0
    %v265 = vadd.f32 0.0, %v264
    %266 = vmatmul.f32.gmra.mxu0 %v134
    %v267 = vpop.f32.mrf.mxu0
    %v268 = vadd.f32 0.0, %v267
    %269 = vmatmul.f32.gmra.mxu0 %v137
    %v270 = vpop.f32.mrf.mxu0
    %v271 = vadd.f32 0.0, %v270
    %272 = vmatmul.f32.gmra.mxu0 %v140
    %v273 = vpop.f32.mrf.mxu0
    %v274 = vadd.f32 0.0, %v273
    %275 = vmatmul.f32.gmra.mxu0 %v143
    %v276 = vpop.f32.mrf.mxu0
    %v277 = vadd.f32 0.0, %v276
    %278 = vmatmul.f32.gmra.mxu0 %v146
    %v279 = vpop.f32.mrf.mxu0
    %v280 = vadd.f32 0.0, %v279
    %281 = vmatmul.f32.gmra.mxu0 %v149
    %v282 = vpop.f32.mrf.mxu0
    %v283 = vadd.f32 0.0, %v282
    %284 = vmatmul.f32.gmra.mxu0 %v152
    %v285 = vpop.f32.mrf.mxu0
    %v286 = vadd.f32 0.0, %v285
    %287 = vmatmul.f32.gmra.mxu0 %v155
    %v288 = vpop.f32.mrf.mxu0
    %v289 = vadd.f32 0.0, %v288
    %290 = vmatmul.f32.gmra.mxu0 %v158
    %v291 = vpop.f32.mrf.mxu0
    %v292 = vadd.f32 0.0, %v291
    %293 = vmatmul.f32.gmra.mxu0 %v161
    %v294 = vpop.f32.mrf.mxu0
    %v295 = vadd.f32 0.0, %v294
    %296 = vmatmul.f32.gmra.mxu0 %v164
    %v297 = vpop.f32.mrf.mxu0
    %v298 = vadd.f32 0.0, %v297
    %299 = vmatmul.f32.gmra.mxu0 %v167
    %v300 = vpop.f32.mrf.mxu0
    %v301 = vadd.f32 0.0, %v300
    %302 = vmatmul.f32.gmra.mxu0 %v170
    %v303 = vpop.f32.mrf.mxu0
    %v304 = vadd.f32 0.0, %v303
    %305 = vmatmul.f32.gmra.mxu0 %v173
    %v306 = vpop.f32.mrf.mxu0
    %v307 = vadd.f32 0.0, %v306
    %308 = vmatmul.f32.gmra.mxu0 %v176
    %v309 = vpop.f32.mrf.mxu0
    %v310 = vadd.f32 0.0, %v309
    %311 = vmatmul.f32.gmra.mxu0 %v179
    %v312 = vpop.f32.mrf.mxu0
    %v313 = vadd.f32 0.0, %v312
    %314 = vmatmul.f32.gmra.mxu0 %v182
    %v315 = vpop.f32.mrf.mxu0
    %v316 = vadd.f32 0.0, %v315
    %317 = vmatmul.f32.gmra.mxu0 %v185
    %v318 = vpop.f32.mrf.mxu0
    %v319 = vadd.f32 0.0, %v318
    %320 = vmatmul.f32.gmra.mxu0 %v188
    %v321 = vpop.f32.mrf.mxu0
    %v322 = vadd.f32 0.0, %v321
    %323 = vmatmul.f32.gmra.mxu0 %v191
    %v324 = vpop.f32.mrf.mxu0
    %v325 = vadd.f32 0.0, %v324
    %326 = vmatmul.f32.gmra.mxu0 %v194
    %v327 = vpop.f32.mrf.mxu0
    %v328 = vadd.f32 0.0, %v327
    %329 = vmatmul.f32.gmra.mxu0 %v197
    %v330 = vpop.f32.mrf.mxu0
    %v331 = vadd.f32 0.0, %v330
    %332 = vmatmul.f32.gmra.mxu0 %v200
    %v333 = vpop.f32.mrf.mxu0
    %v334 = vadd.f32 0.0, %v333
    %335 = vmatmul.f32.gmra.mxu0 %v203
    %v336 = vpop.f32.mrf.mxu0
    %v337 = vadd.f32 0.0, %v336
    %338 = vmatmul.f32.gmra.mxu0 %v206
    %v339 = vpop.f32.mrf.mxu0
    %v340 = vadd.f32 0.0, %v339
    %341 = vmatmul.f32.gmra.mxu0 %v209
    %v342 = vpop.f32.mrf.mxu0
    %v343 = vadd.f32 0.0, %v342
    %344 = vdwg.mxu0
    %345 = vmatpush.msra.mxu0 0.0
    %346 = vmatpush.msra.mxu0 0.0
    %347 = vmatpush.msra.mxu0 0.0
    %348 = vmatpush.msra.mxu0 0.0
    %349 = vmatpush.msra.mxu0 0.0
    %350 = vmatpush.msra.mxu0 0.0
    %351 = vmatpush.msra.mxu0 0.0
    %352 = vmatpush.msra.mxu0 0.0
    %353 = vmatpush.msra.mxu0 0.0
    %354 = vmatpush.msra.mxu0 0.0
    %355 = vmatpush.msra.mxu0 0.0
    %356 = vmatpush.msra.mxu0 0.0
    %357 = vmatpush.msra.mxu0 0.0
    %358 = vmatpush.msra.mxu0 0.0
    %359 = vmatpush.msra.mxu0 0.0
    %360 = vmatpush.msra.mxu0 %v214
    %361 = vmatmul.f32.gmra.mxu0 %v104
    %v362 = vpop.f32.mrf.mxu0
    %v363 = vadd.f32 0.0, %v362
    %364 = vmatmul.f32.gmra.mxu0 %v107
    %v365 = vpop.f32.mrf.mxu0
    %v366 = vadd.f32 0.0, %v365
    %367 = vmatmul.f32.gmra.mxu0 %v110
    %v368 = vpop.f32.mrf.mxu0
    %v369 = vadd.f32 0.0, %v368
    %370 = vmatmul.f32.gmra.mxu0 %v113
    %v371 = vpop.f32.mrf.mxu0
    %v372 = vadd.f32 0.0, %v371
    %373 = vmatmul.f32.gmra.mxu0 %v116
    %v374 = vpop.f32.mrf.mxu0
    %v375 = vadd.f32 0.0, %v374
    %376 = vmatmul.f32.gmra.mxu0 %v119
    %v377 = vpop.f32.mrf.mxu0
    %v378 = vadd.f32 0.0, %v377
    %379 = vmatmul.f32.gmra.mxu0 %v122
    %v380 = vpop.f32.mrf.mxu0
    %v381 = vadd.f32 0.0, %v380
    %382 = vmatmul.f32.gmra.mxu0 %v125
    %v383 = vpop.f32.mrf.mxu0
    %v384 = vadd.f32 0.0, %v383
    %385 = vmatmul.f32.gmra.mxu0 %v128
    %v386 = vpop.f32.mrf.mxu0
    %v387 = vadd.f32 0.0, %v386
    %388 = vmatmul.f32.gmra.mxu0 %v131
    %v389 = vpop.f32.mrf.mxu0
    %v390 = vadd.f32 0.0, %v389
    %391 = vmatmul.f32.gmra.mxu0 %v134
    %v392 = vpop.f32.mrf.mxu0
    %v393 = vadd.f32 0.0, %v392
    %394 = vmatmul.f32.gmra.mxu0 %v137
    %v395 = vpop.f32.mrf.mxu0
    %v396 = vadd.f32 0.0, %v395
    %397 = vmatmul.f32.gmra.mxu0 %v140
    %v398 = vpop.f32.mrf.mxu0
    %v399 = vadd.f32 0.0, %v398
    %400 = vmatmul.f32.gmra.mxu0 %v143
    %v401 = vpop.f32.mrf.mxu0
    %v402 = vadd.f32 0.0, %v401
    %403 = vmatmul.f32.gmra.mxu0 %v146
    %v404 = vpop.f32.mrf.mxu0
    %v405 = vadd.f32 0.0, %v404
    %406 = vmatmul.f32.gmra.mxu0 %v149
    %v407 = vpop.f32.mrf.mxu0
    %v408 = vadd.f32 0.0, %v407
    %409 = vmatmul.f32.gmra.mxu0 %v152
    %v410 = vpop.f32.mrf.mxu0
    %v411 = vadd.f32 0.0, %v410
    %412 = vmatmul.f32.gmra.mxu0 %v155
    %v413 = vpop.f32.mrf.mxu0
    %v414 = vadd.f32 0.0, %v413
    %415 = vmatmul.f32.gmra.mxu0 %v158
    %v416 = vpop.f32.mrf.mxu0
    %v417 = vadd.f32 0.0, %v416
    %418 = vmatmul.f32.gmra.mxu0 %v161
    %v419 = vpop.f32.mrf.mxu0
    %v420 = vadd.f32 0.0, %v419
    %421 = vmatmul.f32.gmra.mxu0 %v164
    %v422 = vpop.f32.mrf.mxu0
    %v423 = vadd.f32 0.0, %v422
    %424 = vmatmul.f32.gmra.mxu0 %v167
    %v425 = vpop.f32.mrf.mxu0
    %v426 = vadd.f32 0.0, %v425
    %427 = vmatmul.f32.gmra.mxu0 %v170
    %v428 = vpop.f32.mrf.mxu0
    %v429 = vadd.f32 0.0, %v428
    %430 = vmatmul.f32.gmra.mxu0 %v173
    %v431 = vpop.f32.mrf.mxu0
    %v432 = vadd.f32 0.0, %v431
    %433 = vmatmul.f32.gmra.mxu0 %v176
    %v434 = vpop.f32.mrf.mxu0
    %v435 = vadd.f32 0.0, %v434
    %436 = vmatmul.f32.gmra.mxu0 %v179
    %v437 = vpop.f32.mrf.mxu0
    %v438 = vadd.f32 0.0, %v437
    %439 = vmatmul.f32.gmra.mxu0 %v182
    %v440 = vpop.f32.mrf.mxu0
    %v441 = vadd.f32 0.0, %v440
    %442 = vmatmul.f32.gmra.mxu0 %v185
    %v443 = vpop.f32.mrf.mxu0
    %v444 = vadd.f32 0.0, %v443
    %445 = vmatmul.f32.gmra.mxu0 %v188
    %v446 = vpop.f32.mrf.mxu0
    %v447 = vadd.f32 0.0, %v446
    %448 = vmatmul.f32.gmra.mxu0 %v191
    %v449 = vpop.f32.mrf.mxu0
    %v450 = vadd.f32 0.0, %v449
    %451 = vmatmul.f32.gmra.mxu0 %v194
    %v452 = vpop.f32.mrf.mxu0
    %v453 = vadd.f32 0.0, %v452
    %454 = vmatmul.f32.gmra.mxu0 %v197
    %v455 = vpop.f32.mrf.mxu0
    %v456 = vadd.f32 0.0, %v455
    %457 = vmatmul.f32.gmra.mxu0 %v200
    %v458 = vpop.f32.mrf.mxu0
    %v459 = vadd.f32 0.0, %v458
    %460 = vmatmul.f32.gmra.mxu0 %v203
    %v461 = vpop.f32.mrf.mxu0
    %v462 = vadd.f32 0.0, %v461
    %463 = vmatmul.f32.gmra.mxu0 %v206
    %v464 = vpop.f32.mrf.mxu0
    %v465 = vadd.f32 0.0, %v464
    %466 = vmatmul.f32.gmra.mxu0 %v209
    %v467 = vpop.f32.mrf.mxu0
    %v468 = vadd.f32 0.0, %v467
    %469 = vdwg.mxu0
    %470 = vmatpush.msra.mxu0 0.0
    %471 = vmatpush.msra.mxu0 0.0
    %472 = vmatpush.msra.mxu0 0.0
    %473 = vmatpush.msra.mxu0 0.0
    %474 = vmatpush.msra.mxu0 0.0
    %475 = vmatpush.msra.mxu0 0.0
    %476 = vmatpush.msra.mxu0 0.0
    %477 = vmatpush.msra.mxu0 0.0
    %478 = vmatpush.msra.mxu0 0.0
    %479 = vmatpush.msra.mxu0 0.0
    %480 = vmatpush.msra.mxu0 0.0
    %481 = vmatpush.msra.mxu0 0.0
    %482 = vmatpush.msra.mxu0 0.0
    %483 = vmatpush.msra.mxu0 0.0
    %484 = vmatpush.msra.mxu0 0.0
    %485 = vmatpush.msra.mxu0 %v216
    %486 = vmatmul.f32.gmra.mxu0 %v104
    %v487 = vpop.f32.mrf.mxu0
    %v488 = vadd.f32 0.0, %v487
    %489 = vmatmul.f32.gmra.mxu0 %v107
    %v490 = vpop.f32.mrf.mxu0
    %v491 = vadd.f32 0.0, %v490
    %492 = vmatmul.f32.gmra.mxu0 %v110
    %v493 = vpop.f32.mrf.mxu0
    %v494 = vadd.f32 0.0, %v493
    %495 = vmatmul.f32.gmra.mxu0 %v113
    %v496 = vpop.f32.mrf.mxu0
    %v497 = vadd.f32 0.0, %v496
    %498 = vmatmul.f32.gmra.mxu0 %v116
    %v499 = vpop.f32.mrf.mxu0
    %v500 = vadd.f32 0.0, %v499
    %501 = vmatmul.f32.gmra.mxu0 %v119
    %v502 = vpop.f32.mrf.mxu0
    %v503 = vadd.f32 0.0, %v502
    %504 = vmatmul.f32.gmra.mxu0 %v122
    %v505 = vpop.f32.mrf.mxu0
    %v506 = vadd.f32 0.0, %v505
    %507 = vmatmul.f32.gmra.mxu0 %v125
    %v508 = vpop.f32.mrf.mxu0
    %v509 = vadd.f32 0.0, %v508
    %510 = vmatmul.f32.gmra.mxu0 %v128
    %v511 = vpop.f32.mrf.mxu0
    %v512 = vadd.f32 0.0, %v511
    %513 = vmatmul.f32.gmra.mxu0 %v131
    %v514 = vpop.f32.mrf.mxu0
    %v515 = vadd.f32 0.0, %v514
    %516 = vmatmul.f32.gmra.mxu0 %v134
    %v517 = vpop.f32.mrf.mxu0
    %v518 = vadd.f32 0.0, %v517
    %519 = vmatmul.f32.gmra.mxu0 %v137
    %v520 = vpop.f32.mrf.mxu0
    %v521 = vadd.f32 0.0, %v520
    %522 = vmatmul.f32.gmra.mxu0 %v140
    %v523 = vpop.f32.mrf.mxu0
    %v524 = vadd.f32 0.0, %v523
    %525 = vmatmul.f32.gmra.mxu0 %v143
    %v526 = vpop.f32.mrf.mxu0
    %v527 = vadd.f32 0.0, %v526
    %528 = vmatmul.f32.gmra.mxu0 %v146
    %v529 = vpop.f32.mrf.mxu0
    %v530 = vadd.f32 0.0, %v529
    %531 = vmatmul.f32.gmra.mxu0 %v149
    %v532 = vpop.f32.mrf.mxu0
    %v533 = vadd.f32 0.0, %v532
    %534 = vmatmul.f32.gmra.mxu0 %v152
    %v535 = vpop.f32.mrf.mxu0
    %v536 = vadd.f32 0.0, %v535
    %537 = vmatmul.f32.gmra.mxu0 %v155
    %v538 = vpop.f32.mrf.mxu0
    %v539 = vadd.f32 0.0, %v538
    %540 = vmatmul.f32.gmra.mxu0 %v158
    %v541 = vpop.f32.mrf.mxu0
    %v542 = vadd.f32 0.0, %v541
    %543 = vmatmul.f32.gmra.mxu0 %v161
    %v544 = vpop.f32.mrf.mxu0
    %v545 = vadd.f32 0.0, %v544
    %546 = vmatmul.f32.gmra.mxu0 %v164
    %v547 = vpop.f32.mrf.mxu0
    %v548 = vadd.f32 0.0, %v547
    %549 = vmatmul.f32.gmra.mxu0 %v167
    %v550 = vpop.f32.mrf.mxu0
    %v551 = vadd.f32 0.0, %v550
    %552 = vmatmul.f32.gmra.mxu0 %v170
    %v553 = vpop.f32.mrf.mxu0
    %v554 = vadd.f32 0.0, %v553
    %555 = vmatmul.f32.gmra.mxu0 %v173
    %v556 = vpop.f32.mrf.mxu0
    %v557 = vadd.f32 0.0, %v556
    %558 = vmatmul.f32.gmra.mxu0 %v176
    %v559 = vpop.f32.mrf.mxu0
    %v560 = vadd.f32 0.0, %v559
    %561 = vmatmul.f32.gmra.mxu0 %v179
    %v562 = vpop.f32.mrf.mxu0
    %v563 = vadd.f32 0.0, %v562
    %564 = vmatmul.f32.gmra.mxu0 %v182
    %v565 = vpop.f32.mrf.mxu0
    %v566 = vadd.f32 0.0, %v565
    %567 = vmatmul.f32.gmra.mxu0 %v185
    %v568 = vpop.f32.mrf.mxu0
    %v569 = vadd.f32 0.0, %v568
    %570 = vmatmul.f32.gmra.mxu0 %v188
    %v571 = vpop.f32.mrf.mxu0
    %v572 = vadd.f32 0.0, %v571
    %573 = vmatmul.f32.gmra.mxu0 %v191
    %v574 = vpop.f32.mrf.mxu0
    %v575 = vadd.f32 0.0, %v574
    %576 = vmatmul.f32.gmra.mxu0 %v194
    %v577 = vpop.f32.mrf.mxu0
    %v578 = vadd.f32 0.0, %v577
    %579 = vmatmul.f32.gmra.mxu0 %v197
    %v580 = vpop.f32.mrf.mxu0
    %v581 = vadd.f32 0.0, %v580
    %582 = vmatmul.f32.gmra.mxu0 %v200
    %v583 = vpop.f32.mrf.mxu0
    %v584 = vadd.f32 0.0, %v583
    %585 = vmatmul.f32.gmra.mxu0 %v203
    %v586 = vpop.f32.mrf.mxu0
    %v587 = vadd.f32 0.0, %v586
    %588 = vmatmul.f32.gmra.mxu0 %v206
    %v589 = vpop.f32.mrf.mxu0
    %v590 = vadd.f32 0.0, %v589
    %591 = vmatmul.f32.gmra.mxu0 %v209
    %v592 = vpop.f32.mrf.mxu0
    %v593 = vadd.f32 0.0, %v592
    %594 = vdwg.mxu0
    %595 = vmatpush.msra.mxu0 0.0
    %596 = vmatpush.msra.mxu0 0.0
    %597 = vmatpush.msra.mxu0 0.0
    %598 = vmatpush.msra.mxu0 0.0
    %599 = vmatpush.msra.mxu0 0.0
    %600 = vmatpush.msra.mxu0 0.0
    %601 = vmatpush.msra.mxu0 0.0
    %602 = vmatpush.msra.mxu0 0.0
    %603 = vmatpush.msra.mxu0 0.0
    %604 = vmatpush.msra.mxu0 0.0
    %605 = vmatpush.msra.mxu0 0.0
    %606 = vmatpush.msra.mxu0 0.0
    %607 = vmatpush.msra.mxu0 0.0
    %608 = vmatpush.msra.mxu0 0.0
    %609 = vmatpush.msra.mxu0 0.0
    %610 = vmatpush.msra.mxu0 %v218
    %611 = vmatmul.f32.gmra.mxu0 %v104
    %v612 = vpop.f32.mrf.mxu0
    %v613 = vadd.f32 0.0, %v612
    %614 = vmatmul.f32.gmra.mxu0 %v107
    %v615 = vpop.f32.mrf.mxu0
    %v616 = vadd.f32 0.0, %v615
    %617 = vmatmul.f32.gmra.mxu0 %v110
    %v618 = vpop.f32.mrf.mxu0
    %v619 = vadd.f32 0.0, %v618
    %620 = vmatmul.f32.gmra.mxu0 %v113
    %v621 = vpop.f32.mrf.mxu0
    %v622 = vadd.f32 0.0, %v621
    %623 = vmatmul.f32.gmra.mxu0 %v116
    %v624 = vpop.f32.mrf.mxu0
    %v625 = vadd.f32 0.0, %v624
    %626 = vmatmul.f32.gmra.mxu0 %v119
    %v627 = vpop.f32.mrf.mxu0
    %v628 = vadd.f32 0.0, %v627
    %629 = vmatmul.f32.gmra.mxu0 %v122
    %v630 = vpop.f32.mrf.mxu0
    %v631 = vadd.f32 0.0, %v630
    %632 = vmatmul.f32.gmra.mxu0 %v125
    %v633 = vpop.f32.mrf.mxu0
    %v634 = vadd.f32 0.0, %v633
    %635 = vmatmul.f32.gmra.mxu0 %v128
    %v636 = vpop.f32.mrf.mxu0
    %v637 = vadd.f32 0.0, %v636
    %638 = vmatmul.f32.gmra.mxu0 %v131
    %v639 = vpop.f32.mrf.mxu0
    %v640 = vadd.f32 0.0, %v639
    %641 = vmatmul.f32.gmra.mxu0 %v134
    %v642 = vpop.f32.mrf.mxu0
    %v643 = vadd.f32 0.0, %v642
    %644 = vmatmul.f32.gmra.mxu0 %v137
    %v645 = vpop.f32.mrf.mxu0
    %v646 = vadd.f32 0.0, %v645
    %647 = vmatmul.f32.gmra.mxu0 %v140
    %v648 = vpop.f32.mrf.mxu0
    %v649 = vadd.f32 0.0, %v648
    %650 = vmatmul.f32.gmra.mxu0 %v143
    %v651 = vpop.f32.mrf.mxu0
    %v652 = vadd.f32 0.0, %v651
    %653 = vmatmul.f32.gmra.mxu0 %v146
    %v654 = vpop.f32.mrf.mxu0
    %v655 = vadd.f32 0.0, %v654
    %656 = vmatmul.f32.gmra.mxu0 %v149
    %v657 = vpop.f32.mrf.mxu0
    %v658 = vadd.f32 0.0, %v657
    %659 = vmatmul.f32.gmra.mxu0 %v152
    %v660 = vpop.f32.mrf.mxu0
    %v661 = vadd.f32 0.0, %v660
    %662 = vmatmul.f32.gmra.mxu0 %v155
    %v663 = vpop.f32.mrf.mxu0
    %v664 = vadd.f32 0.0, %v663
    %665 = vmatmul.f32.gmra.mxu0 %v158
    %v666 = vpop.f32.mrf.mxu0
    %v667 = vadd.f32 0.0, %v666
    %668 = vmatmul.f32.gmra.mxu0 %v161
    %v669 = vpop.f32.mrf.mxu0
    %v670 = vadd.f32 0.0, %v669
    %671 = vmatmul.f32.gmra.mxu0 %v164
    %v672 = vpop.f32.mrf.mxu0
    %v673 = vadd.f32 0.0, %v672
    %674 = vmatmul.f32.gmra.mxu0 %v167
    %v675 = vpop.f32.mrf.mxu0
    %v676 = vadd.f32 0.0, %v675
    %677 = vmatmul.f32.gmra.mxu0 %v170
    %v678 = vpop.f32.mrf.mxu0
    %v679 = vadd.f32 0.0, %v678
    %680 = vmatmul.f32.gmra.mxu0 %v173
    %v681 = vpop.f32.mrf.mxu0
    %v682 = vadd.f32 0.0, %v681
    %683 = vmatmul.f32.gmra.mxu0 %v176
    %v684 = vpop.f32.mrf.mxu0
    %v685 = vadd.f32 0.0, %v684
    %686 = vmatmul.f32.gmra.mxu0 %v179
    %v687 = vpop.f32.mrf.mxu0
    %v688 = vadd.f32 0.0, %v687
    %689 = vmatmul.f32.gmra.mxu0 %v182
    %v690 = vpop.f32.mrf.mxu0
    %v691 = vadd.f32 0.0, %v690
    %692 = vmatmul.f32.gmra.mxu0 %v185
    %v693 = vpop.f32.mrf.mxu0
    %v694 = vadd.f32 0.0, %v693
    %695 = vmatmul.f32.gmra.mxu0 %v188
    %v696 = vpop.f32.mrf.mxu0
    %v697 = vadd.f32 0.0, %v696
    %698 = vmatmul.f32.gmra.mxu0 %v191
    %v699 = vpop.f32.mrf.mxu0
    %v700 = vadd.f32 0.0, %v699
    %701 = vmatmul.f32.gmra.mxu0 %v194
    %v702 = vpop.f32.mrf.mxu0
    %v703 = vadd.f32 0.0, %v702
    %704 = vmatmul.f32.gmra.mxu0 %v197
    %v705 = vpop.f32.mrf.mxu0
    %v706 = vadd.f32 0.0, %v705
    %707 = vmatmul.f32.gmra.mxu0 %v200
    %v708 = vpop.f32.mrf.mxu0
    %v709 = vadd.f32 0.0, %v708
    %710 = vmatmul.f32.gmra.mxu0 %v203
    %v711 = vpop.f32.mrf.mxu0
    %v712 = vadd.f32 0.0, %v711
    %713 = vmatmul.f32.gmra.mxu0 %v206
    %v714 = vpop.f32.mrf.mxu0
    %v715 = vadd.f32 0.0, %v714
    %716 = vmatmul.f32.gmra.mxu0 %v209
    %v717 = vpop.f32.mrf.mxu0
    %v718 = vadd.f32 0.0, %v717
    %719 = vdwg.mxu0
    %720 = vrot.lane.b32.xlu0 %v238, 34
    %v721 = vpop.permute.xlu0 %720
    %722 = vrot.lane.b32.xlu0 %v363, 34
    %v723 = vpop.permute.xlu0 %722
    %724 = vrot.lane.b32.xlu0 %v488, 34
    %v725 = vpop.permute.xlu0 %724
    %726 = vrot.lane.b32.xlu0 %v613, 34
    %v727 = vpop.permute.xlu0 %726
    %v728 = vlaneseq
    %v729 = vand.u32 %v728, 127
    %vm730 = vcmp.lt.s32.totalorder %v729, 34
    %v731 = vsel %vm730, %v725, %v727
    %v732 = vsel %vm730, %v723, %v725
    %v733 = vsel %vm730, %v721, %v723
    %v734 = vsel %vm730, %v727, %v721
    %v735 = vld [vmem:[%s1] ss:$8 sm:$0xf]
    %v737 = vperm.slane %v735, 0
    %v738 = vperm.slane %v735, 1
    %v739 = vperm.slane %v735, 2
    %v740 = vperm.slane %v735, 3
    %v745 = vmul.f32 %v734, %v737
    %v746 = vmul.f32 %v733, %v738
    %v747 = vmul.f32 %v732, %v739
    %v748 = vmul.f32 %v731, %v740
    %749 = vrot.lane.b32.xlu0 %v241, 32
    %v750 = vpop.permute.xlu0 %749
    %751 = vrot.lane.b32.xlu0 %v366, 32
    %v752 = vpop.permute.xlu0 %751
    %753 = vrot.lane.b32.xlu0 %v491, 32
    %v754 = vpop.permute.xlu0 %753
    %755 = vrot.lane.b32.xlu0 %v616, 32
    %v756 = vpop.permute.xlu0 %755
    %vm757 = vcmp.lt.s32.totalorder %v729, 32
    %v758 = vsel %vm757, %v754, %v756
    %v759 = vsel %vm757, %v752, %v754
    %v760 = vsel %vm757, %v750, %v752
    %v761 = vsel %vm757, %v756, %v750
    %s762 = scalar_lea.vmem %s1, 1
    %v763 = vld [vmem:[%s762] ss:$8 sm:$0xf]
    %v765 = vperm.slane %v763, 0
    %v766 = vperm.slane %v763, 1
    %v767 = vperm.slane %v763, 2
    %v768 = vperm.slane %v763, 3
    %v773 = vmul.f32 %v761, %v765
    %v774 = vmul.f32 %v760, %v766
    %v775 = vmul.f32 %v759, %v767
    %v776 = vmul.f32 %v758, %v768
    %v777 = vadd.f32 %v745, %v773
    %v778 = vadd.f32 %v746, %v774
    %v779 = vadd.f32 %v747, %v775
    %v780 = vadd.f32 %v748, %v776
    %781 = vrot.lane.b32.xlu0 %v244, 30
    %v782 = vpop.permute.xlu0 %781
    %783 = vrot.lane.b32.xlu0 %v369, 30
    %v784 = vpop.permute.xlu0 %783
    %785 = vrot.lane.b32.xlu0 %v494, 30
    %v786 = vpop.permute.xlu0 %785
    %787 = vrot.lane.b32.xlu0 %v619, 30
    %v788 = vpop.permute.xlu0 %787
    %vm789 = vcmp.lt.s32.totalorder %v729, 30
    %v790 = vsel %vm789, %v786, %v788
    %v791 = vsel %vm789, %v784, %v786
    %v792 = vsel %vm789, %v782, %v784
    %v793 = vsel %vm789, %v788, %v782
    %s794 = scalar_lea.vmem %s1, 2
    %v795 = vld [vmem:[%s794] ss:$8 sm:$0xf]
    %v797 = vperm.slane %v795, 0
    %v798 = vperm.slane %v795, 1
    %v799 = vperm.slane %v795, 2
    %v800 = vperm.slane %v795, 3
    %v805 = vmul.f32 %v793, %v797
    %v806 = vmul.f32 %v792, %v798
    %v807 = vmul.f32 %v791, %v799
    %v808 = vmul.f32 %v790, %v800
    %v809 = vadd.f32 %v777, %v805
    %v810 = vadd.f32 %v778, %v806
    %v811 = vadd.f32 %v779, %v807
    %v812 = vadd.f32 %v780, %v808
    %813 = vrot.lane.b32.xlu0 %v247, 2
    %v814 = vpop.permute.xlu0 %813
    %815 = vrot.lane.b32.xlu0 %v372, 2
    %v816 = vpop.permute.xlu0 %815
    %817 = vrot.lane.b32.xlu0 %v497, 2
    %v818 = vpop.permute.xlu0 %817
    %819 = vrot.lane.b32.xlu0 %v622, 2
    %v820 = vpop.permute.xlu0 %819
    %vm821 = vcmp.lt.s32.totalorder %v729, 2
    %v822 = vsel %vm821, %v818, %v820
    %v823 = vsel %vm821, %v816, %v818
    %v824 = vsel %vm821, %v814, %v816
    %v825 = vsel %vm821, %v820, %v814
    %s826 = scalar_lea.vmem %s1, 3
    %v827 = vld [vmem:[%s826] ss:$8 sm:$0xf]
    %v829 = vperm.slane %v827, 0
    %v830 = vperm.slane %v827, 1
    %v831 = vperm.slane %v827, 2
    %v832 = vperm.slane %v827, 3
    %v837 = vmul.f32 %v825, %v829
    %v838 = vmul.f32 %v824, %v830
    %v839 = vmul.f32 %v823, %v831
    %v840 = vmul.f32 %v822, %v832
    %v841 = vadd.f32 %v809, %v837
    %v842 = vadd.f32 %v810, %v838
    %v843 = vadd.f32 %v811, %v839
    %v844 = vadd.f32 %v812, %v840
    %v845 = vadd.f32 %v841, %v250
    %v846 = vadd.f32 %v842, %v375
    %v847 = vadd.f32 %v843, %v500
    %v848 = vadd.f32 %v844, %v625
    %849 = vrot.lane.b32.xlu0 %v253, 126
    %v850 = vpop.permute.xlu0 %849
    %851 = vrot.lane.b32.xlu0 %v378, 126
    %v852 = vpop.permute.xlu0 %851
    %853 = vrot.lane.b32.xlu0 %v503, 126
    %v854 = vpop.permute.xlu0 %853
    %855 = vrot.lane.b32.xlu0 %v628, 126
    %v856 = vpop.permute.xlu0 %855
    %vm857 = vcmp.lt.s32.totalorder %v729, 126
    %v858 = vsel %vm857, %v854, %v856
    %v859 = vsel %vm857, %v852, %v854
    %v860 = vsel %vm857, %v850, %v852
    %v861 = vsel %vm857, %v856, %v850
    %s862 = scalar_lea.vmem %s1, 4
    %v863 = vld [vmem:[%s862] ss:$8 sm:$0xf]
    %v865 = vperm.slane %v863, 0
    %v866 = vperm.slane %v863, 1
    %v867 = vperm.slane %v863, 2
    %v868 = vperm.slane %v863, 3
    %v873 = vmul.f32 %v860, %v865
    %v874 = vmul.f32 %v859, %v866
    %v875 = vmul.f32 %v858, %v867
    %v876 = vmul.f32 %v861, %v868
    %v877 = vadd.f32 %v845, %v873
    %v878 = vadd.f32 %v846, %v874
    %v879 = vadd.f32 %v847, %v875
    %v880 = vadd.f32 %v848, %v876
    %881 = vrot.lane.b32.xlu0 %v256, 98
    %v882 = vpop.permute.xlu0 %881
    %883 = vrot.lane.b32.xlu0 %v381, 98
    %v884 = vpop.permute.xlu0 %883
    %885 = vrot.lane.b32.xlu0 %v506, 98
    %v886 = vpop.permute.xlu0 %885
    %887 = vrot.lane.b32.xlu0 %v631, 98
    %v888 = vpop.permute.xlu0 %887
    %vm889 = vcmp.lt.s32.totalorder %v729, 98
    %v890 = vsel %vm889, %v886, %v888
    %v891 = vsel %vm889, %v884, %v886
    %v892 = vsel %vm889, %v882, %v884
    %v893 = vsel %vm889, %v888, %v882
    %s894 = scalar_lea.vmem %s1, 5
    %v895 = vld [vmem:[%s894] ss:$8 sm:$0xf]
    %v897 = vperm.slane %v895, 0
    %v898 = vperm.slane %v895, 1
    %v899 = vperm.slane %v895, 2
    %v900 = vperm.slane %v895, 3
    %v905 = vmul.f32 %v892, %v897
    %v906 = vmul.f32 %v891, %v898
    %v907 = vmul.f32 %v890, %v899
    %v908 = vmul.f32 %v893, %v900
    %v909 = vadd.f32 %v877, %v905
    %v910 = vadd.f32 %v878, %v906
    %v911 = vadd.f32 %v879, %v907
    %v912 = vadd.f32 %v880, %v908
    %913 = vrot.lane.b32.xlu0 %v259, 96
    %v914 = vpop.permute.xlu0 %913
    %915 = vrot.lane.b32.xlu0 %v384, 96
    %v916 = vpop.permute.xlu0 %915
    %917 = vrot.lane.b32.xlu0 %v509, 96
    %v918 = vpop.permute.xlu0 %917
    %919 = vrot.lane.b32.xlu0 %v634, 96
    %v920 = vpop.permute.xlu0 %919
    %vm921 = vcmp.lt.s32.totalorder %v729, 96
    %v922 = vsel %vm921, %v918, %v920
    %v923 = vsel %vm921, %v916, %v918
    %v924 = vsel %vm921, %v914, %v916
    %v925 = vsel %vm921, %v920, %v914
    %s926 = scalar_lea.vmem %s1, 6
    %v927 = vld [vmem:[%s926] ss:$8 sm:$0xf]
    %v929 = vperm.slane %v927, 0
    %v930 = vperm.slane %v927, 1
    %v931 = vperm.slane %v927, 2
    %v932 = vperm.slane %v927, 3
    %v937 = vmul.f32 %v924, %v929
    %v938 = vmul.f32 %v923, %v930
    %v939 = vmul.f32 %v922, %v931
    %v940 = vmul.f32 %v925, %v932
    %v941 = vadd.f32 %v909, %v937
    %v942 = vadd.f32 %v910, %v938
    %v943 = vadd.f32 %v911, %v939
    %v944 = vadd.f32 %v912, %v940
    %945 = vrot.lane.b32.xlu0 %v262, 94
    %v946 = vpop.permute.xlu0 %945
    %947 = vrot.lane.b32.xlu0 %v387, 94
    %v948 = vpop.permute.xlu0 %947
    %949 = vrot.lane.b32.xlu0 %v512, 94
    %v950 = vpop.permute.xlu0 %949
    %951 = vrot.lane.b32.xlu0 %v637, 94
    %v952 = vpop.permute.xlu0 %951
    %vm953 = vcmp.lt.s32.totalorder %v729, 94
    %v954 = vsel %vm953, %v950, %v952
    %v955 = vsel %vm953, %v948, %v950
    %v956 = vsel %vm953, %v946, %v948
    %v957 = vsel %vm953, %v952, %v946
    %s958 = scalar_lea.vmem %s1, 7
    %v959 = vld [vmem:[%s958] ss:$8 sm:$0xf]
    %v961 = vperm.slane %v959, 0
    %v962 = vperm.slane %v959, 1
    %v963 = vperm.slane %v959, 2
    %v964 = vperm.slane %v959, 3
    %v969 = vmul.f32 %v956, %v961
    %v970 = vmul.f32 %v955, %v962
    %v971 = vmul.f32 %v954, %v963
    %v972 = vmul.f32 %v957, %v964
    %v973 = vadd.f32 %v941, %v969
    %v974 = vadd.f32 %v942, %v970
    %v975 = vadd.f32 %v943, %v971
    %v976 = vadd.f32 %v944, %v972
    %v977 = vld [vmem:[#allocation4] sm:$0xff]
    %979 = vset.pattern.permute.xlu0 0
    %980 = vperm.xlu0 %979, %v977
    %v981 = vpop.permute.xlu0 %980
    %v983 = vadd.f32 %v973, %v981
    %v984 = vadd.f32 %v974, %v981
    %v985 = vadd.f32 %v975, %v981
    %v986 = vadd.f32 %v976, %v981
    %v987 = vmax.f32 %v983, 0.0
    %v988 = vmax.f32 %v984, 0.0
    %v989 = vmax.f32 %v985, 0.0
    %v990 = vmax.f32 %v986, 0.0
    %991 = vrot.lane.b32.xlu0 %v265, 68
    %v992 = vpop.permute.xlu0 %991
    %993 = vrot.lane.b32.xlu0 %v390, 68
    %v994 = vpop.permute.xlu0 %993
    %995 = vrot.lane.b32.xlu0 %v515, 68
    %v996 = vpop.permute.xlu0 %995
    %997 = vrot.lane.b32.xlu0 %v640, 68
    %v998 = vpop.permute.xlu0 %997
    %vm999 = vcmp.lt.s32.totalorder %v729, 68
    %v1000 = vsel %vm999, %v996, %v998
    %v1001 = vsel %vm999, %v994, %v996
    %v1002 = vsel %vm999, %v992, %v994
    %v1003 = vsel %vm999, %v998, %v992
    %s1004 = scalar_lea.vmem %s1, 32
    %v1005 = vld [vmem:[%s1004] ss:$8 sm:$0xf]
    %v1007 = vperm.slane %v1005, 0
    %v1008 = vperm.slane %v1005, 1
    %v1009 = vperm.slane %v1005, 2
    %v1010 = vperm.slane %v1005, 3
    %v1015 = vmul.f32 %v1003, %v1007
    %v1016 = vmul.f32 %v1002, %v1008
    %v1017 = vmul.f32 %v1001, %v1009
    %v1018 = vmul.f32 %v1000, %v1010
    %1019 = vrot.lane.b32.xlu0 %v268, 64
    %v1020 = vpop.permute.xlu0 %1019
    %1021 = vrot.lane.b32.xlu0 %v393, 64
    %v1022 = vpop.permute.xlu0 %1021
    %1023 = vrot.lane.b32.xlu0 %v518, 64
    %v1024 = vpop.permute.xlu0 %1023
    %1025 = vrot.lane.b32.xlu0 %v643, 64
    %v1026 = vpop.permute.xlu0 %1025
    %vm1027 = vcmp.lt.s32.totalorder %v729, 64
    %v1028 = vsel %vm1027, %v1024, %v1026
    %v1029 = vsel %vm1027, %v1022, %v1024
    %v1030 = vsel %vm1027, %v1020, %v1022
    %v1031 = vsel %vm1027, %v1026, %v1020
    %s1032 = scalar_lea.vmem %s1, 33
    %v1033 = vld [vmem:[%s1032] ss:$8 sm:$0xf]
    %v1035 = vperm.slane %v1033, 0
    %v1036 = vperm.slane %v1033, 1
    %v1037 = vperm.slane %v1033, 2
    %v1038 = vperm.slane %v1033, 3
    %v1043 = vmul.f32 %v1031, %v1035
    %v1044 = vmul.f32 %v1030, %v1036
    %v1045 = vmul.f32 %v1029, %v1037
    %v1046 = vmul.f32 %v1028, %v1038
    %v1047 = vadd.f32 %v1015, %v1043
    %v1048 = vadd.f32 %v1016, %v1044
    %v1049 = vadd.f32 %v1017, %v1045
    %v1050 = vadd.f32 %v1018, %v1046
    %1051 = vrot.lane.b32.xlu0 %v271, 60
    %v1052 = vpop.permute.xlu0 %1051
    %1053 = vrot.lane.b32.xlu0 %v396, 60
    %v1054 = vpop.permute.xlu0 %1053
    %1055 = vrot.lane.b32.xlu0 %v521, 60
    %v1056 = vpop.permute.xlu0 %1055
    %1057 = vrot.lane.b32.xlu0 %v646, 60
    %v1058 = vpop.permute.xlu0 %1057
    %vm1059 = vcmp.lt.s32.totalorder %v729, 60
    %v1060 = vsel %vm1059, %v1056, %v1058
    %v1061 = vsel %vm1059, %v1054, %v1056
    %v1062 = vsel %vm1059, %v1052, %v1054
    %v1063 = vsel %vm1059, %v1058, %v1052
    %s1064 = scalar_lea.vmem %s1, 34
    %v1065 = vld [vmem:[%s1064] ss:$8 sm:$0xf]
    %v1067 = vperm.slane %v1065, 0
    %v1068 = vperm.slane %v1065, 1
    %v1069 = vperm.slane %v1065, 2
    %v1070 = vperm.slane %v1065, 3
    %v1075 = vmul.f32 %v1063, %v1067
    %v1076 = vmul.f32 %v1062, %v1068
    %v1077 = vmul.f32 %v1061, %v1069
    %v1078 = vmul.f32 %v1060, %v1070
    %v1079 = vadd.f32 %v1047, %v1075
    %v1080 = vadd.f32 %v1048, %v1076
    %v1081 = vadd.f32 %v1049, %v1077
    %v1082 = vadd.f32 %v1050, %v1078
    %1083 = vrot.lane.b32.xlu0 %v274, 4
    %v1084 = vpop.permute.xlu0 %1083
    %1085 = vrot.lane.b32.xlu0 %v399, 4
    %v1086 = vpop.permute.xlu0 %1085
    %1087 = vrot.lane.b32.xlu0 %v524, 4
    %v1088 = vpop.permute.xlu0 %1087
    %1089 = vrot.lane.b32.xlu0 %v649, 4
    %v1090 = vpop.permute.xlu0 %1089
    %vm1091 = vcmp.lt.s32.totalorder %v729, 4
    %v1092 = vsel %vm1091, %v1088, %v1090
    %v1093 = vsel %vm1091, %v1086, %v1088
    %v1094 = vsel %vm1091, %v1084, %v1086
    %v1095 = vsel %vm1091, %v1090, %v1084
    %s1096 = scalar_lea.vmem %s1, 35
    %v1097 = vld [vmem:[%s1096] ss:$8 sm:$0xf]
    %v1099 = vperm.slane %v1097, 0
    %v1100 = vperm.slane %v1097, 1
    %v1101 = vperm.slane %v1097, 2
    %v1102 = vperm.slane %v1097, 3
    %v1107 = vmul.f32 %v1095, %v1099
    %v1108 = vmul.f32 %v1094, %v1100
    %v1109 = vmul.f32 %v1093, %v1101
    %v1110 = vmul.f32 %v1092, %v1102
    %v1111 = vadd.f32 %v1079, %v1107
    %v1112 = vadd.f32 %v1080, %v1108
    %v1113 = vadd.f32 %v1081, %v1109
    %v1114 = vadd.f32 %v1082, %v1110
    %v1115 = vadd.f32 %v1111, %v277
    %v1116 = vadd.f32 %v1112, %v402
    %v1117 = vadd.f32 %v1113, %v527
    %v1118 = vadd.f32 %v1114, %v652
    %1119 = vrot.lane.b32.xlu0 %v280, 124
    %v1120 = vpop.permute.xlu0 %1119
    %1121 = vrot.lane.b32.xlu0 %v405, 124
    %v1122 = vpop.permute.xlu0 %1121
    %1123 = vrot.lane.b32.xlu0 %v530, 124
    %v1124 = vpop.permute.xlu0 %1123
    %1125 = vrot.lane.b32.xlu0 %v655, 124
    %v1126 = vpop.permute.xlu0 %1125
    %vm1127 = vcmp.lt.s32.totalorder %v729, 124
    %v1128 = vsel %vm1127, %v1124, %v1126
    %v1129 = vsel %vm1127, %v1122, %v1124
    %v1130 = vsel %vm1127, %v1120, %v1122
    %v1131 = vsel %vm1127, %v1126, %v1120
    %s1132 = scalar_lea.vmem %s1, 36
    %v1133 = vld [vmem:[%s1132] ss:$8 sm:$0xf]
    %v1135 = vperm.slane %v1133, 0
    %v1136 = vperm.slane %v1133, 1
    %v1137 = vperm.slane %v1133, 2
    %v1138 = vperm.slane %v1133, 3
    %v1143 = vmul.f32 %v1130, %v1135
    %v1144 = vmul.f32 %v1129, %v1136
    %v1145 = vmul.f32 %v1128, %v1137
    %v1146 = vmul.f32 %v1131, %v1138
    %v1147 = vadd.f32 %v1115, %v1143
    %v1148 = vadd.f32 %v1116, %v1144
    %v1149 = vadd.f32 %v1117, %v1145
    %v1150 = vadd.f32 %v1118, %v1146
    %1151 = vrot.lane.b32.xlu0 %v283, 68
    %v1152 = vpop.permute.xlu0 %1151
    %1153 = vrot.lane.b32.xlu0 %v408, 68
    %v1154 = vpop.permute.xlu0 %1153
    %1155 = vrot.lane.b32.xlu0 %v533, 68
    %v1156 = vpop.permute.xlu0 %1155
    %1157 = vrot.lane.b32.xlu0 %v658, 68
    %v1158 = vpop.permute.xlu0 %1157
    %v1159 = vsel %vm999, %v1156, %v1158
    %v1160 = vsel %vm999, %v1154, %v1156
    %v1161 = vsel %vm999, %v1152, %v1154
    %v1162 = vsel %vm999, %v1158, %v1152
    %s1163 = scalar_lea.vmem %s1, 37
    %v1164 = vld [vmem:[%s1163] ss:$8 sm:$0xf]
    %v1166 = vperm.slane %v1164, 0
    %v1167 = vperm.slane %v1164, 1
    %v1168 = vperm.slane %v1164, 2
    %v1169 = vperm.slane %v1164, 3
    %v1174 = vmul.f32 %v1161, %v1166
    %v1175 = vmul.f32 %v1160, %v1167
    %v1176 = vmul.f32 %v1159, %v1168
    %v1177 = vmul.f32 %v1162, %v1169
    %v1178 = vadd.f32 %v1147, %v1174
    %v1179 = vadd.f32 %v1148, %v1175
    %v1180 = vadd.f32 %v1149, %v1176
    %v1181 = vadd.f32 %v1150, %v1177
    %1182 = vrot.lane.b32.xlu0 %v286, 64
    %v1183 = vpop.permute.xlu0 %1182
    %1184 = vrot.lane.b32.xlu0 %v411, 64
    %v1185 = vpop.permute.xlu0 %1184
    %1186 = vrot.lane.b32.xlu0 %v536, 64
    %v1187 = vpop.permute.xlu0 %1186
    %1188 = vrot.lane.b32.xlu0 %v661, 64
    %v1189 = vpop.permute.xlu0 %1188
    %v1190 = vsel %vm1027, %v1187, %v1189
    %v1191 = vsel %vm1027, %v1185, %v1187
    %v1192 = vsel %vm1027, %v1183, %v1185
    %v1193 = vsel %vm1027, %v1189, %v1183
    %s1194 = scalar_lea.vmem %s1, 38
    %v1195 = vld [vmem:[%s1194] ss:$8 sm:$0xf]
    %v1197 = vperm.slane %v1195, 0
    %v1198 = vperm.slane %v1195, 1
    %v1199 = vperm.slane %v1195, 2
    %v1200 = vperm.slane %v1195, 3
    %v1205 = vmul.f32 %v1192, %v1197
    %v1206 = vmul.f32 %v1191, %v1198
    %v1207 = vmul.f32 %v1190, %v1199
    %v1208 = vmul.f32 %v1193, %v1200
    %v1209 = vadd.f32 %v1178, %v1205
    %v1210 = vadd.f32 %v1179, %v1206
    %v1211 = vadd.f32 %v1180, %v1207
    %v1212 = vadd.f32 %v1181, %v1208
    %1213 = vrot.lane.b32.xlu0 %v289, 60
    %v1214 = vpop.permute.xlu0 %1213
    %1215 = vrot.lane.b32.xlu0 %v414, 60
    %v1216 = vpop.permute.xlu0 %1215
    %1217 = vrot.lane.b32.xlu0 %v539, 60
    %v1218 = vpop.permute.xlu0 %1217
    %1219 = vrot.lane.b32.xlu0 %v664, 60
    %v1220 = vpop.permute.xlu0 %1219
    %v1221 = vsel %vm1059, %v1218, %v1220
    %v1222 = vsel %vm1059, %v1216, %v1218
    %v1223 = vsel %vm1059, %v1214, %v1216
    %v1224 = vsel %vm1059, %v1220, %v1214
    %s1225 = scalar_lea.vmem %s1, 39
    %v1226 = vld [vmem:[%s1225] ss:$8 sm:$0xf]
    %v1228 = vperm.slane %v1226, 0
    %v1229 = vperm.slane %v1226, 1
    %v1230 = vperm.slane %v1226, 2
    %v1231 = vperm.slane %v1226, 3
    %v1236 = vmul.f32 %v1223, %v1228
    %v1237 = vmul.f32 %v1222, %v1229
    %v1238 = vmul.f32 %v1221, %v1230
    %v1239 = vmul.f32 %v1224, %v1231
    %v1240 = vadd.f32 %v1209, %v1236
    %v1241 = vadd.f32 %v1210, %v1237
    %v1242 = vadd.f32 %v1211, %v1238
    %v1243 = vadd.f32 %v1212, %v1239
    %v1244 = vld [vmem:[#allocation4 + $0x8] sm:$0xff]
    %1246 = vset.pattern.permute.xlu0 0
    %1247 = vperm.xlu0 %1246, %v1244
    %v1248 = vpop.permute.xlu0 %1247
    %v1250 = vadd.f32 %v1240, %v1248
    %v1251 = vadd.f32 %v1241, %v1248
    %v1252 = vadd.f32 %v1242, %v1248
    %v1253 = vadd.f32 %v1243, %v1248
    %v1254 = vmax.f32 %v1250, 0.0
    %v1255 = vmax.f32 %v1251, 0.0
    %v1256 = vmax.f32 %v1252, 0.0
    %v1257 = vmax.f32 %v1253, 0.0
    %1258 = vrot.lane.b32.xlu0 %v292, 8
    %v1259 = vpop.permute.xlu0 %1258
    %1260 = vrot.lane.b32.xlu0 %v417, 8
    %v1261 = vpop.permute.xlu0 %1260
    %1262 = vrot.lane.b32.xlu0 %v542, 8
    %v1263 = vpop.permute.xlu0 %1262
    %1264 = vrot.lane.b32.xlu0 %v667, 8
    %v1265 = vpop.permute.xlu0 %1264
    %vm1266 = vcmp.lt.s32.totalorder %v729, 8
    %v1267 = vsel %vm1266, %v1263, %v1265
    %v1268 = vsel %vm1266, %v1261, %v1263
    %v1269 = vsel %vm1266, %v1259, %v1261
    %v1270 = vsel %vm1266, %v1265, %v1259
    %s1271 = scalar_lea.vmem %s1, 64
    %v1272 = vld [vmem:[%s1271] ss:$8 sm:$0xf]
    %v1274 = vperm.slane %v1272, 0
    %v1275 = vperm.slane %v1272, 1
    %v1276 = vperm.slane %v1272, 2
    %v1277 = vperm.slane %v1272, 3
    %v1282 = vmul.f32 %v1267, %v1274
    %v1283 = vmul.f32 %v1270, %v1275
    %v1284 = vmul.f32 %v1269, %v1276
    %v1285 = vmul.f32 %v1268, %v1277
    %s1286 = scalar_lea.vmem %s1, 65
    %v1287 = vld [vmem:[%s1286] ss:$8 sm:$0xf]
    %v1289 = vperm.slane %v1287, 0
    %v1290 = vperm.slane %v1287, 1
    %v1291 = vperm.slane %v1287, 2
    %v1292 = vperm.slane %v1287, 3
    %v1297 = vmul.f32 %v670, %v1289
    %v1298 = vmul.f32 %v295, %v1290
    %v1299 = vmul.f32 %v420, %v1291
    %v1300 = vmul.f32 %v545, %v1292
    %v1301 = vadd.f32 %v1282, %v1297
    %v1302 = vadd.f32 %v1283, %v1298
    %v1303 = vadd.f32 %v1284, %v1299
    %v1304 = vadd.f32 %v1285, %v1300
    %1305 = vrot.lane.b32.xlu0 %v298, 120
    %v1306 = vpop.permute.xlu0 %1305
    %1307 = vrot.lane.b32.xlu0 %v423, 120
    %v1308 = vpop.permute.xlu0 %1307
    %1309 = vrot.lane.b32.xlu0 %v548, 120
    %v1310 = vpop.permute.xlu0 %1309
    %1311 = vrot.lane.b32.xlu0 %v673, 120
    %v1312 = vpop.permute.xlu0 %1311
    %vm1313 = vcmp.lt.s32.totalorder %v729, 120
    %v1314 = vsel %vm1313, %v1310, %v1312
    %v1315 = vsel %vm1313, %v1308, %v1310
    %v1316 = vsel %vm1313, %v1306, %v1308
    %v1317 = vsel %vm1313, %v1312, %v1306
    %s1318 = scalar_lea.vmem %s1, 66
    %v1319 = vld [vmem:[%s1318] ss:$8 sm:$0xf]
    %v1321 = vperm.slane %v1319, 0
    %v1322 = vperm.slane %v1319, 1
    %v1323 = vperm.slane %v1319, 2
    %v1324 = vperm.slane %v1319, 3
    %v1329 = vmul.f32 %v1317, %v1321
    %v1330 = vmul.f32 %v1316, %v1322
    %v1331 = vmul.f32 %v1315, %v1323
    %v1332 = vmul.f32 %v1314, %v1324
    %v1333 = vadd.f32 %v1301, %v1329
    %v1334 = vadd.f32 %v1302, %v1330
    %v1335 = vadd.f32 %v1303, %v1331
    %v1336 = vadd.f32 %v1304, %v1332
    %1337 = vrot.lane.b32.xlu0 %v301, 8
    %v1338 = vpop.permute.xlu0 %1337
    %1339 = vrot.lane.b32.xlu0 %v426, 8
    %v1340 = vpop.permute.xlu0 %1339
    %1341 = vrot.lane.b32.xlu0 %v551, 8
    %v1342 = vpop.permute.xlu0 %1341
    %1343 = vrot.lane.b32.xlu0 %v676, 8
    %v1344 = vpop.permute.xlu0 %1343
    %v1345 = vsel %vm1266, %v1342, %v1344
    %v1346 = vsel %vm1266, %v1340, %v1342
    %v1347 = vsel %vm1266, %v1338, %v1340
    %v1348 = vsel %vm1266, %v1344, %v1338
    %s1349 = scalar_lea.vmem %s1, 67
    %v1350 = vld [vmem:[%s1349] ss:$8 sm:$0xf]
    %v1352 = vperm.slane %v1350, 0
    %v1353 = vperm.slane %v1350, 1
    %v1354 = vperm.slane %v1350, 2
    %v1355 = vperm.slane %v1350, 3
    %v1360 = vmul.f32 %v1348, %v1352
    %v1361 = vmul.f32 %v1347, %v1353
    %v1362 = vmul.f32 %v1346, %v1354
    %v1363 = vmul.f32 %v1345, %v1355
    %v1364 = vadd.f32 %v1333, %v1360
    %v1365 = vadd.f32 %v1334, %v1361
    %v1366 = vadd.f32 %v1335, %v1362
    %v1367 = vadd.f32 %v1336, %v1363
    %v1368 = vadd.f32 %v1364, %v304
    %v1369 = vadd.f32 %v1365, %v429
    %v1370 = vadd.f32 %v1366, %v554
    %v1371 = vadd.f32 %v1367, %v679
    %1372 = vrot.lane.b32.xlu0 %v307, 120
    %v1373 = vpop.permute.xlu0 %1372
    %1374 = vrot.lane.b32.xlu0 %v432, 120
    %v1375 = vpop.permute.xlu0 %1374
    %1376 = vrot.lane.b32.xlu0 %v557, 120
    %v1377 = vpop.permute.xlu0 %1376
    %1378 = vrot.lane.b32.xlu0 %v682, 120
    %v1379 = vpop.permute.xlu0 %1378
    %v1380 = vsel %vm1313, %v1377, %v1379
    %v1381 = vsel %vm1313, %v1375, %v1377
    %v1382 = vsel %vm1313, %v1373, %v1375
    %v1383 = vsel %vm1313, %v1379, %v1373
    %s1384 = scalar_lea.vmem %s1, 68
    %v1385 = vld [vmem:[%s1384] ss:$8 sm:$0xf]
    %v1387 = vperm.slane %v1385, 0
    %v1388 = vperm.slane %v1385, 1
    %v1389 = vperm.slane %v1385, 2
    %v1390 = vperm.slane %v1385, 3
    %v1395 = vmul.f32 %v1382, %v1387
    %v1396 = vmul.f32 %v1381, %v1388
    %v1397 = vmul.f32 %v1380, %v1389
    %v1398 = vmul.f32 %v1383, %v1390
    %v1399 = vadd.f32 %v1368, %v1395
    %v1400 = vadd.f32 %v1369, %v1396
    %v1401 = vadd.f32 %v1370, %v1397
    %v1402 = vadd.f32 %v1371, %v1398
    %1403 = vrot.lane.b32.xlu0 %v310, 8
    %v1404 = vpop.permute.xlu0 %1403
    %1405 = vrot.lane.b32.xlu0 %v435, 8
    %v1406 = vpop.permute.xlu0 %1405
    %1407 = vrot.lane.b32.xlu0 %v560, 8
    %v1408 = vpop.permute.xlu0 %1407
    %1409 = vrot.lane.b32.xlu0 %v685, 8
    %v1410 = vpop.permute.xlu0 %1409
    %v1411 = vsel %vm1266, %v1408, %v1410
    %v1412 = vsel %vm1266, %v1406, %v1408
    %v1413 = vsel %vm1266, %v1404, %v1406
    %v1414 = vsel %vm1266, %v1410, %v1404
    %s1415 = scalar_lea.vmem %s1, 69
    %v1416 = vld [vmem:[%s1415] ss:$8 sm:$0xf]
    %v1418 = vperm.slane %v1416, 0
    %v1419 = vperm.slane %v1416, 1
    %v1420 = vperm.slane %v1416, 2
    %v1421 = vperm.slane %v1416, 3
    %v1426 = vmul.f32 %v1413, %v1418
    %v1427 = vmul.f32 %v1412, %v1419
    %v1428 = vmul.f32 %v1411, %v1420
    %v1429 = vmul.f32 %v1414, %v1421
    %v1430 = vadd.f32 %v1399, %v1426
    %v1431 = vadd.f32 %v1400, %v1427
    %v1432 = vadd.f32 %v1401, %v1428
    %v1433 = vadd.f32 %v1402, %v1429
    %s1434 = scalar_lea.vmem %s1, 70
    %v1435 = vld [vmem:[%s1434] ss:$8 sm:$0xf]
    %v1437 = vperm.slane %v1435, 0
    %v1438 = vperm.slane %v1435, 1
    %v1439 = vperm.slane %v1435, 2
    %v1440 = vperm.slane %v1435, 3
    %v1445 = vmul.f32 %v438, %v1437
    %v1446 = vmul.f32 %v563, %v1438
    %v1447 = vmul.f32 %v688, %v1439
    %v1448 = vmul.f32 %v313, %v1440
    %v1449 = vadd.f32 %v1430, %v1445
    %v1450 = vadd.f32 %v1431, %v1446
    %v1451 = vadd.f32 %v1432, %v1447
    %v1452 = vadd.f32 %v1433, %v1448
    %1453 = vrot.lane.b32.xlu0 %v316, 120
    %v1454 = vpop.permute.xlu0 %1453
    %1455 = vrot.lane.b32.xlu0 %v441, 120
    %v1456 = vpop.permute.xlu0 %1455
    %1457 = vrot.lane.b32.xlu0 %v566, 120
    %v1458 = vpop.permute.xlu0 %1457
    %1459 = vrot.lane.b32.xlu0 %v691, 120
    %v1460 = vpop.permute.xlu0 %1459
    %v1461 = vsel %vm1313, %v1458, %v1460
    %v1462 = vsel %vm1313, %v1456, %v1458
    %v1463 = vsel %vm1313, %v1454, %v1456
    %v1464 = vsel %vm1313, %v1460, %v1454
    %s1465 = scalar_lea.vmem %s1, 71
    %v1466 = vld [vmem:[%s1465] ss:$8 sm:$0xf]
    %v1468 = vperm.slane %v1466, 0
    %v1469 = vperm.slane %v1466, 1
    %v1470 = vperm.slane %v1466, 2
    %v1471 = vperm.slane %v1466, 3
    %v1476 = vmul.f32 %v1462, %v1468
    %v1477 = vmul.f32 %v1461, %v1469
    %v1478 = vmul.f32 %v1464, %v1470
    %v1479 = vmul.f32 %v1463, %v1471
    %v1480 = vadd.f32 %v1449, %v1476
    %v1481 = vadd.f32 %v1450, %v1477
    %v1482 = vadd.f32 %v1451, %v1478
    %v1483 = vadd.f32 %v1452, %v1479
    %v1484 = vld [vmem:[#allocation4 + $0x10] sm:$0xff]
    %1486 = vset.pattern.permute.xlu0 0
    %1487 = vperm.xlu0 %1486, %v1484
    %v1488 = vpop.permute.xlu0 %1487
    %v1490 = vadd.f32 %v1480, %v1488
    %v1491 = vadd.f32 %v1481, %v1488
    %v1492 = vadd.f32 %v1482, %v1488
    %v1493 = vadd.f32 %v1483, %v1488
    %v1494 = vmax.f32 %v1490, 0.0
    %v1495 = vmax.f32 %v1491, 0.0
    %v1496 = vmax.f32 %v1492, 0.0
    %v1497 = vmax.f32 %v1493, 0.0
    %1498 = vrot.lane.b32.xlu0 %v319, 76
    %v1499 = vpop.permute.xlu0 %1498
    %1500 = vrot.lane.b32.xlu0 %v444, 76
    %v1501 = vpop.permute.xlu0 %1500
    %1502 = vrot.lane.b32.xlu0 %v569, 76
    %v1503 = vpop.permute.xlu0 %1502
    %1504 = vrot.lane.b32.xlu0 %v694, 76
    %v1505 = vpop.permute.xlu0 %1504
    %vm1506 = vcmp.lt.s32.totalorder %v729, 76
    %v1507 = vsel %vm1506, %v1503, %v1505
    %v1508 = vsel %vm1506, %v1501, %v1503
    %v1509 = vsel %vm1506, %v1499, %v1501
    %v1510 = vsel %vm1506, %v1505, %v1499
    %s1511 = scalar_lea.vmem %s1, 96
    %v1512 = vld [vmem:[%s1511] ss:$8 sm:$0xf]
    %v1514 = vperm.slane %v1512, 0
    %v1515 = vperm.slane %v1512, 1
    %v1516 = vperm.slane %v1512, 2
    %v1517 = vperm.slane %v1512, 3
    %v1522 = vmul.f32 %v1507, %v1514
    %v1523 = vmul.f32 %v1510, %v1515
    %v1524 = vmul.f32 %v1509, %v1516
    %v1525 = vmul.f32 %v1508, %v1517
    %1526 = vrot.lane.b32.xlu0 %v322, 64
    %v1527 = vpop.permute.xlu0 %1526
    %1528 = vrot.lane.b32.xlu0 %v447, 64
    %v1529 = vpop.permute.xlu0 %1528
    %1530 = vrot.lane.b32.xlu0 %v572, 64
    %v1531 = vpop.permute.xlu0 %1530
    %1532 = vrot.lane.b32.xlu0 %v697, 64
    %v1533 = vpop.permute.xlu0 %1532
    %v1534 = vsel %vm1027, %v1531, %v1533
    %v1535 = vsel %vm1027, %v1529, %v1531
    %v1536 = vsel %vm1027, %v1527, %v1529
    %v1537 = vsel %vm1027, %v1533, %v1527
    %s1538 = scalar_lea.vmem %s1, 97
    %v1539 = vld [vmem:[%s1538] ss:$8 sm:$0xf]
    %v1541 = vperm.slane %v1539, 0
    %v1542 = vperm.slane %v1539, 1
    %v1543 = vperm.slane %v1539, 2
    %v1544 = vperm.slane %v1539, 3
    %v1549 = vmul.f32 %v1534, %v1541
    %v1550 = vmul.f32 %v1537, %v1542
    %v1551 = vmul.f32 %v1536, %v1543
    %v1552 = vmul.f32 %v1535, %v1544
    %v1553 = vadd.f32 %v1522, %v1549
    %v1554 = vadd.f32 %v1523, %v1550
    %v1555 = vadd.f32 %v1524, %v1551
    %v1556 = vadd.f32 %v1525, %v1552
    %1557 = vrot.lane.b32.xlu0 %v325, 52
    %v1558 = vpop.permute.xlu0 %1557
    %1559 = vrot.lane.b32.xlu0 %v450, 52
    %v1560 = vpop.permute.xlu0 %1559
    %1561 = vrot.lane.b32.xlu0 %v575, 52
    %v1562 = vpop.permute.xlu0 %1561
    %1563 = vrot.lane.b32.xlu0 %v700, 52
    %v1564 = vpop.permute.xlu0 %1563
    %vm1565 = vcmp.lt.s32.totalorder %v729, 52
    %v1566 = vsel %vm1565, %v1562, %v1564
    %v1567 = vsel %vm1565, %v1560, %v1562
    %v1568 = vsel %vm1565, %v1558, %v1560
    %v1569 = vsel %vm1565, %v1564, %v1558
    %s1570 = scalar_lea.vmem %s1, 98
    %v1571 = vld [vmem:[%s1570] ss:$8 sm:$0xf]
    %v1573 = vperm.slane %v1571, 0
    %v1574 = vperm.slane %v1571, 1
    %v1575 = vperm.slane %v1571, 2
    %v1576 = vperm.slane %v1571, 3
    %v1581 = vmul.f32 %v1566, %v1573
    %v1582 = vmul.f32 %v1569, %v1574
    %v1583 = vmul.f32 %v1568, %v1575
    %v1584 = vmul.f32 %v1567, %v1576
    %v1585 = vadd.f32 %v1553, %v1581
    %v1586 = vadd.f32 %v1554, %v1582
    %v1587 = vadd.f32 %v1555, %v1583
    %v1588 = vadd.f32 %v1556, %v1584
    %1589 = vrot.lane.b32.xlu0 %v328, 12
    %v1590 = vpop.permute.xlu0 %1589
    %1591 = vrot.lane.b32.xlu0 %v453, 12
    %v1592 = vpop.permute.xlu0 %1591
    %1593 = vrot.lane.b32.xlu0 %v578, 12
    %v1594 = vpop.permute.xlu0 %1593
    %1595 = vrot.lane.b32.xlu0 %v703, 12
    %v1596 = vpop.permute.xlu0 %1595
    %vm1597 = vcmp.lt.s32.totalorder %v729, 12
    %v1598 = vsel %vm1597, %v1594, %v1596
    %v1599 = vsel %vm1597, %v1592, %v1594
    %v1600 = vsel %vm1597, %v1590, %v1592
    %v1601 = vsel %vm1597, %v1596, %v1590
    %s1602 = scalar_lea.vmem %s1, 99
    %v1603 = vld [vmem:[%s1602] ss:$8 sm:$0xf]
    %v1605 = vperm.slane %v1603, 0
    %v1606 = vperm.slane %v1603, 1
    %v1607 = vperm.slane %v1603, 2
    %v1608 = vperm.slane %v1603, 3
    %v1613 = vmul.f32 %v1601, %v1605
    %v1614 = vmul.f32 %v1600, %v1606
    %v1615 = vmul.f32 %v1599, %v1607
    %v1616 = vmul.f32 %v1598, %v1608
    %v1617 = vadd.f32 %v1585, %v1613
    %v1618 = vadd.f32 %v1586, %v1614
    %v1619 = vadd.f32 %v1587, %v1615
    %v1620 = vadd.f32 %v1588, %v1616
    %v1621 = vadd.f32 %v1617, %v331
    %v1622 = vadd.f32 %v1618, %v456
    %v1623 = vadd.f32 %v1619, %v581
    %v1624 = vadd.f32 %v1620, %v706
    %1625 = vrot.lane.b32.xlu0 %v334, 116
    %v1626 = vpop.permute.xlu0 %1625
    %1627 = vrot.lane.b32.xlu0 %v459, 116
    %v1628 = vpop.permute.xlu0 %1627
    %1629 = vrot.lane.b32.xlu0 %v584, 116
    %v1630 = vpop.permute.xlu0 %1629
    %1631 = vrot.lane.b32.xlu0 %v709, 116
    %v1632 = vpop.permute.xlu0 %1631
    %vm1633 = vcmp.lt.s32.totalorder %v729, 116
    %v1634 = vsel %vm1633, %v1630, %v1632
    %v1635 = vsel %vm1633, %v1628, %v1630
    %v1636 = vsel %vm1633, %v1626, %v1628
    %v1637 = vsel %vm1633, %v1632, %v1626
    %s1638 = scalar_lea.vmem %s1, 100
    %v1639 = vld [vmem:[%s1638] ss:$8 sm:$0xf]
    %v1641 = vperm.slane %v1639, 0
    %v1642 = vperm.slane %v1639, 1
    %v1643 = vperm.slane %v1639, 2
    %v1644 = vperm.slane %v1639, 3
    %v1649 = vmul.f32 %v1636, %v1641
    %v1650 = vmul.f32 %v1635, %v1642
    %v1651 = vmul.f32 %v1634, %v1643
    %v1652 = vmul.f32 %v1637, %v1644
    %v1653 = vadd.f32 %v1621, %v1649
    %v1654 = vadd.f32 %v1622, %v1650
    %v1655 = vadd.f32 %v1623, %v1651
    %v1656 = vadd.f32 %v1624, %v1652
    %1657 = vrot.lane.b32.xlu0 %v337, 76
    %v1658 = vpop.permute.xlu0 %1657
    %1659 = vrot.lane.b32.xlu0 %v462, 76
    %v1660 = vpop.permute.xlu0 %1659
    %1661 = vrot.lane.b32.xlu0 %v587, 76
    %v1662 = vpop.permute.xlu0 %1661
    %1663 = vrot.lane.b32.xlu0 %v712, 76
    %v1664 = vpop.permute.xlu0 %1663
    %v1665 = vsel %vm1506, %v1662, %v1664
    %v1666 = vsel %vm1506, %v1660, %v1662
    %v1667 = vsel %vm1506, %v1658, %v1660
    %v1668 = vsel %vm1506, %v1664, %v1658
    %s1669 = scalar_lea.vmem %s1, 101
    %v1670 = vld [vmem:[%s1669] ss:$8 sm:$0xf]
    %v1672 = vperm.slane %v1670, 0
    %v1673 = vperm.slane %v1670, 1
    %v1674 = vperm.slane %v1670, 2
    %v1675 = vperm.slane %v1670, 3
    %v1680 = vmul.f32 %v1666, %v1672
    %v1681 = vmul.f32 %v1665, %v1673
    %v1682 = vmul.f32 %v1668, %v1674
    %v1683 = vmul.f32 %v1667, %v1675
    %v1684 = vadd.f32 %v1653, %v1680
    %v1685 = vadd.f32 %v1654, %v1681
    %v1686 = vadd.f32 %v1655, %v1682
    %v1687 = vadd.f32 %v1656, %v1683
    %1688 = vrot.lane.b32.xlu0 %v340, 64
    %v1689 = vpop.permute.xlu0 %1688
    %1690 = vrot.lane.b32.xlu0 %v465, 64
    %v1691 = vpop.permute.xlu0 %1690
    %1692 = vrot.lane.b32.xlu0 %v590, 64
    %v1693 = vpop.permute.xlu0 %1692
    %1694 = vrot.lane.b32.xlu0 %v715, 64
    %v1695 = vpop.permute.xlu0 %1694
    %v1696 = vsel %vm1027, %v1693, %v1695
    %v1697 = vsel %vm1027, %v1691, %v1693
    %v1698 = vsel %vm1027, %v1689, %v1691
    %v1699 = vsel %vm1027, %v1695, %v1689
    %s1700 = scalar_lea.vmem %s1, 102
    %v1701 = vld [vmem:[%s1700] ss:$8 sm:$0xf]
    %v1703 = vperm.slane %v1701, 0
    %v1704 = vperm.slane %v1701, 1
    %v1705 = vperm.slane %v1701, 2
    %v1706 = vperm.slane %v1701, 3
    %v1711 = vmul.f32 %v1697, %v1703
    %v1712 = vmul.f32 %v1696, %v1704
    %v1713 = vmul.f32 %v1699, %v1705
    %v1714 = vmul.f32 %v1698, %v1706
    %v1715 = vadd.f32 %v1684, %v1711
    %v1716 = vadd.f32 %v1685, %v1712
    %v1717 = vadd.f32 %v1686, %v1713
    %v1718 = vadd.f32 %v1687, %v1714
    %1719 = vrot.lane.b32.xlu0 %v343, 52
    %v1720 = vpop.permute.xlu0 %1719
    %1721 = vrot.lane.b32.xlu0 %v468, 52
    %v1722 = vpop.permute.xlu0 %1721
    %1723 = vrot.lane.b32.xlu0 %v593, 52
    %v1724 = vpop.permute.xlu0 %1723
    %1725 = vrot.lane.b32.xlu0 %v718, 52
    %v1726 = vpop.permute.xlu0 %1725
    %v1727 = vsel %vm1565, %v1724, %v1726
    %v1728 = vsel %vm1565, %v1722, %v1724
    %v1729 = vsel %vm1565, %v1720, %v1722
    %v1730 = vsel %vm1565, %v1726, %v1720
    %s1731 = scalar_lea.vmem %s1, 103
    %v1732 = vld [vmem:[%s1731] ss:$8 sm:$0xf]
    %v1734 = vperm.slane %v1732, 0
    %v1735 = vperm.slane %v1732, 1
    %v1736 = vperm.slane %v1732, 2
    %v1737 = vperm.slane %v1732, 3
    %v1742 = vmul.f32 %v1728, %v1734
    %v1743 = vmul.f32 %v1727, %v1735
    %v1744 = vmul.f32 %v1730, %v1736
    %v1745 = vmul.f32 %v1729, %v1737
    %v1746 = vadd.f32 %v1715, %v1742
    %v1747 = vadd.f32 %v1716, %v1743
    %v1748 = vadd.f32 %v1717, %v1744
    %v1749 = vadd.f32 %v1718, %v1745
    %v1750 = vld [vmem:[#allocation4 + $0x18] sm:$0xff]
    %1752 = vset.pattern.permute.xlu0 0
    %1753 = vperm.xlu0 %1752, %v1750
    %v1754 = vpop.permute.xlu0 %1753
    %v1756 = vadd.f32 %v1746, %v1754
    %v1757 = vadd.f32 %v1747, %v1754
    %v1758 = vadd.f32 %v1748, %v1754
    %v1759 = vadd.f32 %v1749, %v1754
    %v1760 = vmax.f32 %v1756, 0.0
    %v1761 = vmax.f32 %v1757, 0.0
    %v1762 = vmax.f32 %v1758, 0.0
    %v1763 = vmax.f32 %v1759, 0.0
    %v1764 = vld [vmem:[%s4] sm:$0xf]
    %v1765 = vld [vmem:[%s5] sm:$0xf]
    %1767 = vset.pattern.permute.xlu0 0
    %1768 = vperm.xlu0 %1767, %v1765
    %v1769 = vpop.permute.xlu0 %1768
    %vm1771 = vcmask 261120
    %v1773 = vsel %vm1771, %v1764, 0
    %1775 = vmatpush.msra.mxu0 0.0
    %1776 = vmatpush.msra.mxu0 0.0
    %1777 = vmatpush.msra.mxu0 0.0
    %1778 = vmatpush.msra.mxu0 0.0
    %1779 = vmatpush.msra.mxu0 0.0
    %1780 = vmatpush.msra.mxu0 0.0
    %1781 = vmatpush.msra.mxu0 0.0
    %1782 = vmatpush.msra.mxu0 0.0
    %1783 = vmatpush.msra.mxu0 0.0
    %1784 = vmatpush.msra.mxu0 0.0
    %1785 = vmatpush.msra.mxu0 0.0
    %1786 = vmatpush.msra.mxu0 0.0
    %1787 = vmatpush.msra.mxu0 %v1760
    %1788 = vmatpush.msra.mxu0 %v1494
    %1789 = vmatpush.msra.mxu0 %v1254
    %1790 = vmatpush.msra.mxu0 %v987
    %1791 = vmatmul.f32.gmra.mxu0 %v1773
    %v1792 = vpop.f32.mrf.mxu0
    %v1793 = vadd.f32 %v1769, %v1792
    %1794 = vdwg.mxu0
    %1795 = vmatpush.msra.mxu0 0.0
    %1796 = vmatpush.msra.mxu0 0.0
    %1797 = vmatpush.msra.mxu0 0.0
    %1798 = vmatpush.msra.mxu0 0.0
    %1799 = vmatpush.msra.mxu0 0.0
    %1800 = vmatpush.msra.mxu0 0.0
    %1801 = vmatpush.msra.mxu0 0.0
    %1802 = vmatpush.msra.mxu0 0.0
    %1803 = vmatpush.msra.mxu0 0.0
    %1804 = vmatpush.msra.mxu0 0.0
    %1805 = vmatpush.msra.mxu0 0.0
    %1806 = vmatpush.msra.mxu0 0.0
    %1807 = vmatpush.msra.mxu0 %v1761
    %1808 = vmatpush.msra.mxu0 %v1495
    %1809 = vmatpush.msra.mxu0 %v1255
    %1810 = vmatpush.msra.mxu0 %v988
    %1811 = vmatmul.f32.gmra.mxu0 %v1773
    %v1812 = vpop.f32.mrf.mxu0
    %v1813 = vadd.f32 %v1769, %v1812
    %1814 = vdwg.mxu0
    %1815 = vmatpush.msra.mxu0 0.0
    %1816 = vmatpush.msra.mxu0 0.0
    %1817 = vmatpush.msra.mxu0 0.0
    %1818 = vmatpush.msra.mxu0 0.0
    %1819 = vmatpush.msra.mxu0 0.0
    %1820 = vmatpush.msra.mxu0 0.0
    %1821 = vmatpush.msra.mxu0 0.0
    %1822 = vmatpush.msra.mxu0 0.0
    %1823 = vmatpush.msra.mxu0 0.0
    %1824 = vmatpush.msra.mxu0 0.0
    %1825 = vmatpush.msra.mxu0 0.0
    %1826 = vmatpush.msra.mxu0 0.0
    %1827 = vmatpush.msra.mxu0 %v1762
    %1828 = vmatpush.msra.mxu0 %v1496
    %1829 = vmatpush.msra.mxu0 %v1256
    %1830 = vmatpush.msra.mxu0 %v989
    %1831 = vmatmul.f32.gmra.mxu0 %v1773
    %v1832 = vpop.f32.mrf.mxu0
    %v1833 = vadd.f32 %v1769, %v1832
    %1834 = vdwg.mxu0
    %1835 = vmatpush.msra.mxu0 0.0
    %1836 = vmatpush.msra.mxu0 0.0
    %1837 = vmatpush.msra.mxu0 0.0
    %1838 = vmatpush.msra.mxu0 0.0
    %1839 = vmatpush.msra.mxu0 0.0
    %1840 = vmatpush.msra.mxu0 0.0
    %1841 = vmatpush.msra.mxu0 0.0
    %1842 = vmatpush.msra.mxu0 0.0
    %1843 = vmatpush.msra.mxu0 0.0
    %1844 = vmatpush.msra.mxu0 0.0
    %1845 = vmatpush.msra.mxu0 0.0
    %1846 = vmatpush.msra.mxu0 0.0
    %1847 = vmatpush.msra.mxu0 %v1763
    %1848 = vmatpush.msra.mxu0 %v1497
    %1849 = vmatpush.msra.mxu0 %v1257
    %1850 = vmatpush.msra.mxu0 %v990
    %1851 = vmatmul.f32.gmra.mxu0 %v1773
    %v1852 = vpop.f32.mrf.mxu0
    %v1853 = vadd.f32 %v1769, %v1852
    %1854 = vdwg.mxu0
    %v1855 = vmax.f32 %v1793, 0.0
    %v1856 = vmax.f32 %v1813, 0.0
    %v1857 = vmax.f32 %v1833, 0.0
    %v1858 = vmax.f32 %v1853, 0.0
    %v1861 = vrot.slane %v1856, 4
    %v1862 = vsel %vm211, %v1855, %v1861
    %1864 = vst [vmem:[%s6] sm:$0xff] %v1862
    %v1867 = vrot.slane %v1858, 4
    %v1868 = vsel %vm211, %v1857, %v1867
    %s1870 = scalar_lea.vmem %s6, 8
    %1871 = vst [vmem:[%s1870] sm:$0xff] %v1868
    // Predicated region
    $region34: #{forward.1} parent=1 // pred_check
      _
    $region35: #{forward.1} parent=1 // pred_check_branch
      %1873 = sbr.rel (0) target = $region37
    $region36: #{forward.1} parent=1 // pred_region
      _
    $region37: #{forward.1} parent=1 // pred_fallthru
      _
    // Predicated region
    $region38: #{forward.1} parent=1 // pred_check
      _
    $region39: #{forward.1} parent=1 // pred_check_branch
      %1875 = sbr.rel (0) target = $region41
    $region40: #{forward.1} parent=1 // pred_region
      _
    $region41: #{forward.1} parent=1 // pred_fallthru
      _
    %1876 = vsyncpa [#allocation3], 1
    %1877 = vsyncpa [#allocation5], 1

</llo_original>
